<compile_context>
chip_gen: v7x
topology: tpu7x:2x2x1
jax: 0.10.0
libtpu: 0.0.40
codegen_flags: <defaults>
</compile_context>

<pallas_src>
import functools

import jax
import jax.numpy as jnp
from jax.experimental import pallas as pl
from jax.experimental.pallas import tpu as pltpu


# ----------------------------- helpers -----------------------------

def _round_up(x, m):
    return (x + m - 1) // m * m


def _choose_tile(size, align, max_tile, *, repad_if_small=False):
    """Pad `size` to `align` and pick a tile (multiple of `align`) dividing it."""
    padded = _round_up(size, align)
    if padded <= max_tile:
        return padded, padded
    tile = max_tile
    while padded % tile != 0:
        tile -= align
    if repad_if_small and tile < max_tile // 2:
        return _round_up(size, max_tile), max_tile
    return padded, tile


_MATMUL_CP = pltpu.CompilerParams(
    dimension_semantics=("parallel", "parallel", "arbitrary"),
    vmem_limit_bytes=48 * 1024 * 1024)


# ----------------------------- Pallas kernels -----------------------------

def _mm_bn_kernel(x_ref, w_ref, b_ref, o_ref, acc_ref, *, relu):
    """o = maybe_relu((x @ w) + shift); BN scale is pre-folded into w."""
    @pl.when(pl.program_id(2) == 0)
    def _():
        acc_ref[...] = jnp.zeros_like(acc_ref)

    acc_ref[...] += jnp.dot(x_ref[...], w_ref[...],
                            preferred_element_type=jnp.float32)

    @pl.when(pl.program_id(2) == pl.num_programs(2) - 1)
    def _():
        out = acc_ref[...] + b_ref[...]
        if relu:
            out = jnp.maximum(out, 0.0)
        o_ref[...] = out.astype(o_ref.dtype)


def _mm_bn_combine_kernel(x_ref, w_ref, b_ref, r_ref, o_ref, acc_ref, *,
                          out_mult, res_mult):
    """o = relu(out_mult * ((x @ w) + shift) + res_mult * residual)."""
    @pl.when(pl.program_id(2) == 0)
    def _():
        acc_ref[...] = jnp.zeros_like(acc_ref)

    acc_ref[...] += jnp.dot(x_ref[...], w_ref[...],
                            preferred_element_type=jnp.float32)

    @pl.when(pl.program_id(2) == pl.num_programs(2) - 1)
    def _():
        h = acc_ref[...] + b_ref[...]
        r = r_ref[...].astype(jnp.float32)
        o_ref[...] = jnp.maximum(out_mult * h + res_mult * r,
                                 0.0).astype(o_ref.dtype)


def _mean_fc_kernel(x_ref, w_ref, b_ref, o_ref):
    """Global average pool over spatial axis + final Linear, fused (per batch tile)."""
    xm = jnp.mean(x_ref[...].astype(jnp.float32), axis=1)        # (tb, C)
    acc = jnp.dot(xm.astype(jnp.bfloat16), w_ref[...],
                  preferred_element_type=jnp.float32)
    o_ref[...] = (acc + b_ref[...]).astype(o_ref.dtype)


# ----------------------------- kernel wrappers -----------------------------

def matmul_bn(x, w, shift, *, relu, residual=None, out_mult=1.0, res_mult=1.0):
    """Tiled (M,N,K)-gridded matmul fused with BN shift [+ ReLU | + residual]."""
    M, K = x.shape
    N = w.shape[1]
    Mp, tm = _choose_tile(M, 16, 256, repad_if_small=True)   # bf16 sublanes
    Np, tn = _choose_tile(N, 128, 256)                       # lane-dense out
    Kp, tk = _choose_tile(K, 128, 512)

    xp = jnp.pad(x, ((0, Mp - M), (0, Kp - K))).astype(jnp.bfloat16)
    wp = jnp.pad(w, ((0, Kp - K), (0, Np - N))).astype(jnp.bfloat16)
    bp = jnp.pad(shift.astype(jnp.float32).reshape(1, N), ((0, 0), (0, Np - N)))

    grid = (Mp // tm, Np // tn, Kp // tk)
    x_spec = pl.BlockSpec((tm, tk), lambda i, j, k: (i, k))
    w_spec = pl.BlockSpec((tk, tn), lambda i, j, k: (k, j))
    b_spec = pl.BlockSpec((1, tn), lambda i, j, k: (0, j))
    o_spec = pl.BlockSpec((tm, tn), lambda i, j, k: (i, j))
    common = dict(
        out_shape=jax.ShapeDtypeStruct((Mp, Np), jnp.bfloat16),
        grid=grid,
        out_specs=o_spec,
        scratch_shapes=[pltpu.VMEM((tm, tn), jnp.float32)],
        compiler_params=_MATMUL_CP,
    )
    if residual is None:
        out = pl.pallas_call(
            functools.partial(_mm_bn_kernel, relu=relu),
            in_specs=[x_spec, w_spec, b_spec],
            **common,
        )(xp, wp, bp)
    else:
        rp = jnp.pad(residual, ((0, Mp - M), (0, Np - N))).astype(jnp.bfloat16)
        r_spec = pl.BlockSpec((tm, tn), lambda i, j, k: (i, j))
        out = pl.pallas_call(
            functools.partial(_mm_bn_combine_kernel,
                              out_mult=out_mult, res_mult=res_mult),
            in_specs=[x_spec, w_spec, b_spec, r_spec],
            **common,
        )(xp, wp, bp, rp)
    return out[:M, :N]


def im2col(x, kh, kw, stride, pad):
    """NHWC -> (N*Ho*Wo, kh*kw*C) patch matrix (glue; ordering = dy, dx, cin)."""
    N, H, W, C = x.shape
    Ho = (H + 2 * pad - kh) // stride + 1
    Wo = (W + 2 * pad - kw) // stride + 1
    xp = jnp.pad(x, ((0, 0), (pad, pad), (pad, pad), (0, 0)))
    cols = []
    for dy in range(kh):
        for dx in range(kw):
            v = jax.lax.slice(
                xp,
                (0, dy, dx, 0),
                (N, dy + (Ho - 1) * stride + 1, dx + (Wo - 1) * stride + 1, C),
                (1, stride, stride, 1))
            cols.append(v)
    patches = jnp.concatenate(cols, axis=-1)              # (N, Ho, Wo, kh*kw*C)
    return patches.reshape(N * Ho * Wo, kh * kw * C), (N, Ho, Wo)


def conv_bn(x, p, *, stride, pad, relu, residual=None, out_mult=1.0, res_mult=1.0):
    """Conv2d(bias=False) + BatchNorm2d(eval) [+ ReLU | + residual combine]."""
    w, scale, shift = p["w"], p["scale"], p["shift"]
    kh, kw, cin, cout = w.shape
    # TODO(synk): for 3x3 convs, replace im2col with an in-kernel tap (dy,dx)
    # K-accumulation over the padded NHWC activation to cut the 9x patch-matrix
    # HBM traffic (needs element-offset indexing / manual DMA).
    patches, (N, Ho, Wo) = im2col(x, kh, kw, stride, pad)
    wmat = w.reshape(kh * kw * cin, cout) * scale[None, :]   # fold BN scale
    res = None if residual is None else residual.reshape(N * Ho * Wo, cout)
    out = matmul_bn(patches, wmat, shift, relu=relu, residual=res,
                    out_mult=out_mult, res_mult=res_mult)
    return out.reshape(N, Ho, Wo, cout)


def maxpool(x, *, k=3, stride=2, pad=1):
    """MaxPool2d as a fused jnp.maximum chain over the k*k strided views.

    Plain-JAX glue (per review): purely memory-bound, XLA fuses the strided
    slices into a single pass; avoids materializing a (k*k, M, C) stack.
    """
    N, H, W, C = x.shape
    Ho = (H + 2 * pad - k) // stride + 1
    Wo = (W + 2 * pad - k) // stride + 1
    neg = jnp.finfo(x.dtype).min
    xp = jnp.pad(x, ((0, 0), (pad, pad), (pad, pad), (0, 0)), constant_values=neg)
    out = None
    for dy in range(k):
        for dx in range(k):
            v = jax.lax.slice(
                xp,
                (0, dy, dx, 0),
                (N, dy + (Ho - 1) * stride + 1, dx + (Wo - 1) * stride + 1, C),
                (1, stride, stride, 1))
            out = v if out is None else jnp.maximum(out, v)
    return out


def mean_fc(x, w, b):
    """x.mean(H,W) @ w + b, fused in one gridded Pallas kernel (128-padded logits)."""
    N, H, W, C = x.shape
    HW = H * W
    n_cls = w.shape[1]
    Np = _round_up(n_cls, 128)          # lane-dense logit slab
    tb = 8
    Bp = _round_up(N, tb)
    xr = jnp.pad(x.reshape(N, HW, C), ((0, Bp - N), (0, 0), (0, 0)))
    wp = jnp.pad(w, ((0, 0), (0, Np - n_cls))).astype(jnp.bfloat16)
    bp = jnp.pad(b.astype(jnp.float32).reshape(1, n_cls), ((0, 0), (0, Np - n_cls)))
    out = pl.pallas_call(
        _mean_fc_kernel,
        out_shape=jax.ShapeDtypeStruct((Bp, Np), jnp.float32),
        grid=(Bp // tb,),
        in_specs=[pl.BlockSpec((tb, HW, C), lambda i: (i, 0, 0)),
                  pl.BlockSpec((C, Np), lambda i: (0, 0)),
                  pl.BlockSpec((1, Np), lambda i: (0, 0))],
        out_specs=pl.BlockSpec((tb, Np), lambda i: (i, 0)),
        compiler_params=pltpu.CompilerParams(
            dimension_semantics=("parallel",),
            vmem_limit_bytes=48 * 1024 * 1024),
    )(xr, wp, bp)
    return out[:N, :n_cls]


# ----------------------------- parameters -----------------------------

def init_conv_bn(key, kh, kw, cin, cout):
    kw_, kg, kb = jax.random.split(key, 3)
    fan_in = kh * kw * cin
    w = jax.random.normal(kw_, (kh, kw, cin, cout), jnp.float32) / jnp.sqrt(fan_in)
    gamma = 1.0 + 0.1 * jax.random.normal(kg, (cout,), jnp.float32)
    beta = 0.1 * jax.random.normal(kb, (cout,), jnp.float32)
    eps = 1e-5
    # BatchNorm2d in eval mode with running_mean=0, running_var=1:
    #   y = x * gamma/sqrt(var+eps) + beta
    scale = gamma / jnp.sqrt(1.0 + eps)
    shift = beta
    return {"w": w, "scale": scale, "shift": shift}


def init_resnet_params(key, layer_sizes, n_blocks, num_classes, expansion):
    keys = iter(jax.random.split(key, 128))
    params = {"stem": init_conv_bn(next(keys), 7, 7, 3, layer_sizes[0] * expansion)}

    ops = []
    for n, planes in zip(n_blocks, layer_sizes[1:]):
        blocks = []
        for _ in range(n):
            blocks.append((
                init_conv_bn(next(keys), 1, 1, planes * expansion, planes),
                init_conv_bn(next(keys), 3, 3, planes, planes),
                init_conv_bn(next(keys), 1, 1, planes, planes * expansion),
            ))
        ops.append(blocks)
    params["ops"] = ops

    reds = []
    for i, o in zip(layer_sizes[1:], layer_sizes[2:]):
        main = (
            init_conv_bn(next(keys), 1, 1, i * expansion, i),
            init_conv_bn(next(keys), 3, 3, i, i),
            init_conv_bn(next(keys), 1, 1, i, o * expansion),
        )
        short = init_conv_bn(next(keys), 1, 1, i * expansion, o * expansion)
        reds.append((main, short))
    params["reds"] = reds

    kf1, kf2 = jax.random.split(next(keys))
    cfin = layer_sizes[-1] * expansion
    params["fc_w"] = jax.random.normal(kf1, (cfin, num_classes), jnp.float32) / jnp.sqrt(cfin)
    params["fc_b"] = 0.1 * jax.random.normal(kf2, (num_classes,), jnp.float32)
    return params


# ----------------------------- forward -----------------------------

def resnet_forward(params, x_nchw, *, stride=2, res_scale=1.0):
    # Input is NCHW (PyTorch convention); compute is done in NHWC bf16.
    x = jnp.transpose(x_nchw, (0, 2, 3, 1)).astype(jnp.bfloat16)

    # conv1 (7x7 s2 p3) + bn1 + relu, then maxpool 3x3 s2 p1
    x = conv_bn(x, params["stem"], stride=2, pad=3, relu=True)
    x = maxpool(x, k=3, stride=2, pad=1)

    # TODO(synk): nn.Dropout2d layers are treated as inference-mode identity.
    for op_blocks, (red_main, red_short) in zip(params["ops"], params["reds"]):
        # Operation: n bottleneck blocks, x = relu(x + h * res_scale)
        for (p1, p2, p3) in op_blocks:
            h = conv_bn(x, p1, stride=1, pad=0, relu=True)
            h = conv_bn(h, p2, stride=1, pad=1, relu=True)
            x = conv_bn(h, p3, stride=1, pad=0, relu=False,
                        residual=x, out_mult=res_scale, res_mult=1.0)
        # Reduction: main (downsample) branch
        h = conv_bn(x, red_main[0], stride=1, pad=0, relu=True)
        h = conv_bn(h, red_main[1], stride=stride, pad=1, relu=True)
        h = conv_bn(h, red_main[2], stride=1, pad=0, relu=False)
        # shortcut branch s = bn(conv1x1, stride); x = relu(s + h * res_scale)
        x = conv_bn(x, red_short, stride=stride, pad=0, relu=False,
                    residual=h, out_mult=1.0, res_mult=res_scale)

    # x.mean(3).mean(2) + fc, fused into one gridded Pallas kernel
    return mean_fc(x, params["fc_w"], params["fc_b"])


# ----------------------------- main -----------------------------

if __name__ == "__main__":
    layer_sizes = [4, 4, 8]     # layer_sizes[0] == layer_sizes[1] as the model requires
    n_blocks = [1, 1]
    num_classes = 10
    expansion = 4
    stride = 2
    res_scale = 1.0

    key = jax.random.PRNGKey(0)
    kp, kx = jax.random.split(key)
    params = init_resnet_params(kp, layer_sizes, n_blocks, num_classes, expansion)
    x = jax.random.normal(kx, (2, 3, 16, 16), jnp.float32)   # NCHW, like PyTorch

    fwd = jax.jit(functools.partial(resnet_forward, stride=stride, res_scale=res_scale))
    out = fwd(params, x)
    jax.block_until_ready(out)
    assert out.shape == (2, num_classes) and out.dtype == jnp.float32
    print("KERNEL_OK")
</pallas_src>

<mosaic_0001>
module attributes {stable_mosaic.version = 11 : i64} {
  func.func @_mm_bn_kernel(%arg0: i32, %arg1: i32, %arg2: i32, %arg3: memref<128x256xbf16, #tpu.memory_space<vmem>>, %arg4: memref<256x128xbf16, #tpu.memory_space<vmem>>, %arg5: memref<1x128xf32, #tpu.memory_space<vmem>>, %arg6: memref<128x128xbf16, #tpu.memory_space<vmem>>, %arg7: memref<128x128xf32, #tpu.memory_space<vmem>>) attributes {dimension_semantics = [#tpu.dimension_semantics<parallel>, #tpu.dimension_semantics<parallel>, #tpu.dimension_semantics<arbitrary>], iteration_bounds = array<i64: 1, 1, 1>, scalar_prefetch = 0 : i64, scratch_operands = 1 : i64, tpu.core_type = #tpu.core_type<tc>, window_params = [{transform_indices = @transform_0, window_bounds = array<i64: 128, 256>}, {transform_indices = @transform_1, window_bounds = array<i64: 256, 128>}, {transform_indices = @transform_2, window_bounds = array<i64: 1, 128>}, {transform_indices = @transform_3, window_bounds = array<i64: 128, 128>}]} {
    %c0_i32 = arith.constant 0 : i32
    %0 = arith.cmpi eq, %arg2, %c0_i32 : i32
    %1 = arith.extui %0 : i1 to i32
    %c0_i32_0 = arith.constant 0 : i32
    %2 = arith.cmpi ne, %1, %c0_i32_0 : i32
    scf.if %2 {
      %cst_10 = arith.constant 0.000000e+00 : f32
      %12 = vector.broadcast %cst_10 : f32 to vector<128x128xf32>
      %c0_11 = arith.constant 0 : index
      %c0_12 = arith.constant 0 : index
      %13 = vector.load %arg7[%c0_11, %c0_12] : memref<128x128xf32, #tpu.memory_space<vmem>>, vector<128x128xf32>
      tpu.vector_store %arg7[%c0_11, %c0_12], %12 {strides = array<i32>} : memref<128x128xf32, #tpu.memory_space<vmem>>, vector<128x128xf32>,
    } else {
    }
    %c0 = arith.constant 0 : index
    %c0_1 = arith.constant 0 : index
    %3 = vector.load %arg7[%c0, %c0_1] : memref<128x128xf32, #tpu.memory_space<vmem>>, vector<128x128xf32>
    %c0_2 = arith.constant 0 : index
    %c0_3 = arith.constant 0 : index
    %4 = vector.load %arg3[%c0_2, %c0_3] : memref<128x256xbf16, #tpu.memory_space<vmem>>, vector<128x256xbf16>
    %c0_4 = arith.constant 0 : index
    %c0_5 = arith.constant 0 : index
    %5 = vector.load %arg4[%c0_4, %c0_5] : memref<256x128xbf16, #tpu.memory_space<vmem>>, vector<256x128xbf16>
    %cst = arith.constant dense<0.000000e+00> : vector<128x128xf32>
    %6 = tpu.matmul %4, %5, %cst {dimension_numbers = #tpu.dot_dimension_numbers<[1], [0], [0], [1], [0, 0, 1, 1], [], []>} : vector<128x256xbf16>, vector<256x128xbf16>, vector<128x128xf32> -> vector<128x128xf32>
    %7 = arith.addf %3, %6 : vector<128x128xf32>
    %c0_6 = arith.constant 0 : index
    %c0_7 = arith.constant 0 : index
    %8 = vector.load %arg7[%c0_6, %c0_7] : memref<128x128xf32, #tpu.memory_space<vmem>>, vector<128x128xf32>
    tpu.vector_store %arg7[%c0_6, %c0_7], %7 {strides = array<i32>} : memref<128x128xf32, #tpu.memory_space<vmem>>, vector<128x128xf32>,
    %c0_i32_8 = arith.constant 0 : i32
    %9 = arith.cmpi eq, %arg2, %c0_i32_8 : i32
    %10 = arith.extui %9 : i1 to i32
    %c0_i32_9 = arith.constant 0 : i32
    %11 = arith.cmpi ne, %10, %c0_i32_9 : i32
    scf.if %11 {
      %c0_10 = arith.constant 0 : index
      %c0_11 = arith.constant 0 : index
      %12 = vector.load %arg7[%c0_10, %c0_11] : memref<128x128xf32, #tpu.memory_space<vmem>>, vector<128x128xf32>
      %c0_12 = arith.constant 0 : index
      %c0_13 = arith.constant 0 : index
      %13 = vector.load %arg5[%c0_12, %c0_13] : memref<1x128xf32, #tpu.memory_space<vmem>>, vector<1x128xf32>
      %14 = vector.broadcast %13 : vector<1x128xf32> to vector<128x128xf32>
      %15 = arith.addf %12, %14 : vector<128x128xf32>
      %cst_14 = arith.constant 0.000000e+00 : f32
      %16 = vector.broadcast %cst_14 : f32 to vector<128x128xf32>
      %17 = arith.maximumf %15, %16 : vector<128x128xf32>
      %18 = arith.truncf %17 : vector<128x128xf32> to vector<128x128xbf16>
      %c0_15 = arith.constant 0 : index
      %c0_16 = arith.constant 0 : index
      %19 = vector.load %arg6[%c0_15, %c0_16] : memref<128x128xbf16, #tpu.memory_space<vmem>>, vector<128x128xbf16>
      tpu.vector_store %arg6[%c0_15, %c0_16], %18 {strides = array<i32>} : memref<128x128xbf16, #tpu.memory_space<vmem>>, vector<128x128xbf16>,
    } else {
    }
    return
  }
  func.func @transform_0(%arg0: i32, %arg1: i32, %arg2: i32) -> (i32, i32) {
    %c0_i32 = arith.constant 0 : i32
    return %arg0, %arg2 : i32, i32
  }
  func.func @transform_1(%arg0: i32, %arg1: i32, %arg2: i32) -> (i32, i32) {
    %c0_i32 = arith.constant 0 : i32
    return %arg2, %arg1 : i32, i32
  }
  func.func @transform_2(%arg0: i32, %arg1: i32, %arg2: i32) -> (i32, i32) {
    %c0_i32 = arith.constant 0 : i32
    %c0_i32_0 = arith.constant 0 : i32
    return %c0_i32, %arg1 : i32, i32
  }
  func.func @transform_3(%arg0: i32, %arg1: i32, %arg2: i32) -> (i32, i32) {
    %c0_i32 = arith.constant 0 : i32
    return %arg0, %arg1 : i32, i32
  }
}

module attributes {stable_mosaic.version = 11 : i64} {
  func.func @_mm_bn_kernel(%arg0: i32, %arg1: i32, %arg2: i32, %arg3: memref<32x128xbf16, #tpu.memory_space<vmem>>, %arg4: memref<128x128xbf16, #tpu.memory_space<vmem>>, %arg5: memref<1x128xf32, #tpu.memory_space<vmem>>, %arg6: memref<32x128xbf16, #tpu.memory_space<vmem>>, %arg7: memref<32x128xf32, #tpu.memory_space<vmem>>) attributes {dimension_semantics = [#tpu.dimension_semantics<parallel>, #tpu.dimension_semantics<parallel>, #tpu.dimension_semantics<arbitrary>], iteration_bounds = array<i64: 1, 1, 1>, scalar_prefetch = 0 : i64, scratch_operands = 1 : i64, tpu.core_type = #tpu.core_type<tc>, window_params = [{transform_indices = @transform_0, window_bounds = array<i64: 32, 128>}, {transform_indices = @transform_1, window_bounds = array<i64: 128, 128>}, {transform_indices = @transform_2, window_bounds = array<i64: 1, 128>}, {transform_indices = @transform_3, window_bounds = array<i64: 32, 128>}]} {
    %c0_i32 = arith.constant 0 : i32
    %0 = arith.cmpi eq, %arg2, %c0_i32 : i32
    %1 = arith.extui %0 : i1 to i32
    %c0_i32_0 = arith.constant 0 : i32
    %2 = arith.cmpi ne, %1, %c0_i32_0 : i32
    scf.if %2 {
      %cst_10 = arith.constant 0.000000e+00 : f32
      %12 = vector.broadcast %cst_10 : f32 to vector<32x128xf32>
      %c0_11 = arith.constant 0 : index
      %c0_12 = arith.constant 0 : index
      %13 = vector.load %arg7[%c0_11, %c0_12] : memref<32x128xf32, #tpu.memory_space<vmem>>, vector<32x128xf32>
      tpu.vector_store %arg7[%c0_11, %c0_12], %12 {strides = array<i32>} : memref<32x128xf32, #tpu.memory_space<vmem>>, vector<32x128xf32>,
    } else {
    }
    %c0 = arith.constant 0 : index
    %c0_1 = arith.constant 0 : index
    %3 = vector.load %arg7[%c0, %c0_1] : memref<32x128xf32, #tpu.memory_space<vmem>>, vector<32x128xf32>
    %c0_2 = arith.constant 0 : index
    %c0_3 = arith.constant 0 : index
    %4 = vector.load %arg3[%c0_2, %c0_3] : memref<32x128xbf16, #tpu.memory_space<vmem>>, vector<32x128xbf16>
    %c0_4 = arith.constant 0 : index
    %c0_5 = arith.constant 0 : index
    %5 = vector.load %arg4[%c0_4, %c0_5] : memref<128x128xbf16, #tpu.memory_space<vmem>>, vector<128x128xbf16>
    %cst = arith.constant dense<0.000000e+00> : vector<32x128xf32>
    %6 = tpu.matmul %4, %5, %cst {dimension_numbers = #tpu.dot_dimension_numbers<[1], [0], [0], [1], [0, 0, 1, 1], [], []>} : vector<32x128xbf16>, vector<128x128xbf16>, vector<32x128xf32> -> vector<32x128xf32>
    %7 = arith.addf %3, %6 : vector<32x128xf32>
    %c0_6 = arith.constant 0 : index
    %c0_7 = arith.constant 0 : index
    %8 = vector.load %arg7[%c0_6, %c0_7] : memref<32x128xf32, #tpu.memory_space<vmem>>, vector<32x128xf32>
    tpu.vector_store %arg7[%c0_6, %c0_7], %7 {strides = array<i32>} : memref<32x128xf32, #tpu.memory_space<vmem>>, vector<32x128xf32>,
    %c0_i32_8 = arith.constant 0 : i32
    %9 = arith.cmpi eq, %arg2, %c0_i32_8 : i32
    %10 = arith.extui %9 : i1 to i32
    %c0_i32_9 = arith.constant 0 : i32
    %11 = arith.cmpi ne, %10, %c0_i32_9 : i32
    scf.if %11 {
      %c0_10 = arith.constant 0 : index
      %c0_11 = arith.constant 0 : index
      %12 = vector.load %arg7[%c0_10, %c0_11] : memref<32x128xf32, #tpu.memory_space<vmem>>, vector<32x128xf32>
      %c0_12 = arith.constant 0 : index
      %c0_13 = arith.constant 0 : index
      %13 = vector.load %arg5[%c0_12, %c0_13] : memref<1x128xf32, #tpu.memory_space<vmem>>, vector<1x128xf32>
      %14 = vector.broadcast %13 : vector<1x128xf32> to vector<32x128xf32>
      %15 = arith.addf %12, %14 : vector<32x128xf32>
      %cst_14 = arith.constant 0.000000e+00 : f32
      %16 = vector.broadcast %cst_14 : f32 to vector<32x128xf32>
      %17 = arith.maximumf %15, %16 : vector<32x128xf32>
      %18 = arith.truncf %17 : vector<32x128xf32> to vector<32x128xbf16>
      %c0_15 = arith.constant 0 : index
      %c0_16 = arith.constant 0 : index
      %19 = vector.load %arg6[%c0_15, %c0_16] : memref<32x128xbf16, #tpu.memory_space<vmem>>, vector<32x128xbf16>
      tpu.vector_store %arg6[%c0_15, %c0_16], %18 {strides = array<i32>} : memref<32x128xbf16, #tpu.memory_space<vmem>>, vector<32x128xbf16>,
    } else {
    }
    return
  }
  func.func @transform_0(%arg0: i32, %arg1: i32, %arg2: i32) -> (i32, i32) {
    %c0_i32 = arith.constant 0 : i32
    return %arg0, %arg2 : i32, i32
  }
  func.func @transform_1(%arg0: i32, %arg1: i32, %arg2: i32) -> (i32, i32) {
    %c0_i32 = arith.constant 0 : i32
    return %arg2, %arg1 : i32, i32
  }
  func.func @transform_2(%arg0: i32, %arg1: i32, %arg2: i32) -> (i32, i32) {
    %c0_i32 = arith.constant 0 : i32
    %c0_i32_0 = arith.constant 0 : i32
    return %c0_i32, %arg1 : i32, i32
  }
  func.func @transform_3(%arg0: i32, %arg1: i32, %arg2: i32) -> (i32, i32) {
    %c0_i32 = arith.constant 0 : i32
    return %arg0, %arg1 : i32, i32
  }
}

module attributes {stable_mosaic.version = 11 : i64} {
  func.func @_mm_bn_combine_kernel(%arg0: i32, %arg1: i32, %arg2: i32, %arg3: memref<32x128xbf16, #tpu.memory_space<vmem>>, %arg4: memref<128x128xbf16, #tpu.memory_space<vmem>>, %arg5: memref<1x128xf32, #tpu.memory_space<vmem>>, %arg6: memref<32x128xbf16, #tpu.memory_space<vmem>>, %arg7: memref<32x128xbf16, #tpu.memory_space<vmem>>, %arg8: memref<32x128xf32, #tpu.memory_space<vmem>>) attributes {dimension_semantics = [#tpu.dimension_semantics<parallel>, #tpu.dimension_semantics<parallel>, #tpu.dimension_semantics<arbitrary>], iteration_bounds = array<i64: 1, 1, 1>, scalar_prefetch = 0 : i64, scratch_operands = 1 : i64, tpu.core_type = #tpu.core_type<tc>, window_params = [{transform_indices = @transform_0, window_bounds = array<i64: 32, 128>}, {transform_indices = @transform_1, window_bounds = array<i64: 128, 128>}, {transform_indices = @transform_2, window_bounds = array<i64: 1, 128>}, {transform_indices = @transform_3, window_bounds = array<i64: 32, 128>}, {transform_indices = @transform_4, window_bounds = array<i64: 32, 128>}]} {
    %c0_i32 = arith.constant 0 : i32
    %0 = arith.cmpi eq, %arg2, %c0_i32 : i32
    %1 = arith.extui %0 : i1 to i32
    %c0_i32_0 = arith.constant 0 : i32
    %2 = arith.cmpi ne, %1, %c0_i32_0 : i32
    scf.if %2 {
      %cst_10 = arith.constant 0.000000e+00 : f32
      %12 = vector.broadcast %cst_10 : f32 to vector<32x128xf32>
      %c0_11 = arith.constant 0 : index
      %c0_12 = arith.constant 0 : index
      %13 = vector.load %arg8[%c0_11, %c0_12] : memref<32x128xf32, #tpu.memory_space<vmem>>, vector<32x128xf32>
      tpu.vector_store %arg8[%c0_11, %c0_12], %12 {strides = array<i32>} : memref<32x128xf32, #tpu.memory_space<vmem>>, vector<32x128xf32>,
    } else {
    }
    %c0 = arith.constant 0 : index
    %c0_1 = arith.constant 0 : index
    %3 = vector.load %arg8[%c0, %c0_1] : memref<32x128xf32, #tpu.memory_space<vmem>>, vector<32x128xf32>
    %c0_2 = arith.constant 0 : index
    %c0_3 = arith.constant 0 : index
    %4 = vector.load %arg3[%c0_2, %c0_3] : memref<32x128xbf16, #tpu.memory_space<vmem>>, vector<32x128xbf16>
    %c0_4 = arith.constant 0 : index
    %c0_5 = arith.constant 0 : index
    %5 = vector.load %arg4[%c0_4, %c0_5] : memref<128x128xbf16, #tpu.memory_space<vmem>>, vector<128x128xbf16>
    %cst = arith.constant dense<0.000000e+00> : vector<32x128xf32>
    %6 = tpu.matmul %4, %5, %cst {dimension_numbers = #tpu.dot_dimension_numbers<[1], [0], [0], [1], [0, 0, 1, 1], [], []>} : vector<32x128xbf16>, vector<128x128xbf16>, vector<32x128xf32> -> vector<32x128xf32>
    %7 = arith.addf %3, %6 : vector<32x128xf32>
    %c0_6 = arith.constant 0 : index
    %c0_7 = arith.constant 0 : index
    %8 = vector.load %arg8[%c0_6, %c0_7] : memref<32x128xf32, #tpu.memory_space<vmem>>, vector<32x128xf32>
    tpu.vector_store %arg8[%c0_6, %c0_7], %7 {strides = array<i32>} : memref<32x128xf32, #tpu.memory_space<vmem>>, vector<32x128xf32>,
    %c0_i32_8 = arith.constant 0 : i32
    %9 = arith.cmpi eq, %arg2, %c0_i32_8 : i32
    %10 = arith.extui %9 : i1 to i32
    %c0_i32_9 = arith.constant 0 : i32
    %11 = arith.cmpi ne, %10, %c0_i32_9 : i32
    scf.if %11 {
      %c0_10 = arith.constant 0 : index
      %c0_11 = arith.constant 0 : index
      %12 = vector.load %arg8[%c0_10, %c0_11] : memref<32x128xf32, #tpu.memory_space<vmem>>, vector<32x128xf32>
      %c0_12 = arith.constant 0 : index
      %c0_13 = arith.constant 0 : index
      %13 = vector.load %arg5[%c0_12, %c0_13] : memref<1x128xf32, #tpu.memory_space<vmem>>, vector<1x128xf32>
      %14 = vector.broadcast %13 : vector<1x128xf32> to vector<32x128xf32>
      %15 = arith.addf %12, %14 : vector<32x128xf32>
      %c0_14 = arith.constant 0 : index
      %c0_15 = arith.constant 0 : index
      %16 = vector.load %arg6[%c0_14, %c0_15] : memref<32x128xbf16, #tpu.memory_space<vmem>>, vector<32x128xbf16>
      %17 = arith.extf %16 : vector<32x128xbf16> to vector<32x128xf32>
      %cst_16 = arith.constant 1.000000e+00 : f32
      %18 = vector.broadcast %cst_16 : f32 to vector<32x128xf32>
      %19 = arith.mulf %18, %15 : vector<32x128xf32>
      %cst_17 = arith.constant 1.000000e+00 : f32
      %20 = vector.broadcast %cst_17 : f32 to vector<32x128xf32>
      %21 = arith.mulf %20, %17 : vector<32x128xf32>
      %22 = arith.addf %19, %21 : vector<32x128xf32>
      %cst_18 = arith.constant 0.000000e+00 : f32
      %23 = vector.broadcast %cst_18 : f32 to vector<32x128xf32>
      %24 = arith.maximumf %22, %23 : vector<32x128xf32>
      %25 = arith.truncf %24 : vector<32x128xf32> to vector<32x128xbf16>
      %c0_19 = arith.constant 0 : index
      %c0_20 = arith.constant 0 : index
      %26 = vector.load %arg7[%c0_19, %c0_20] : memref<32x128xbf16, #tpu.memory_space<vmem>>, vector<32x128xbf16>
      tpu.vector_store %arg7[%c0_19, %c0_20], %25 {strides = array<i32>} : memref<32x128xbf16, #tpu.memory_space<vmem>>, vector<32x128xbf16>,
    } else {
    }
    return
  }
  func.func @transform_0(%arg0: i32, %arg1: i32, %arg2: i32) -> (i32, i32) {
    %c0_i32 = arith.constant 0 : i32
    return %arg0, %arg2 : i32, i32
  }
  func.func @transform_1(%arg0: i32, %arg1: i32, %arg2: i32) -> (i32, i32) {
    %c0_i32 = arith.constant 0 : i32
    return %arg2, %arg1 : i32, i32
  }
  func.func @transform_2(%arg0: i32, %arg1: i32, %arg2: i32) -> (i32, i32) {
    %c0_i32 = arith.constant 0 : i32
    %c0_i32_0 = arith.constant 0 : i32
    return %c0_i32, %arg1 : i32, i32
  }
  func.func @transform_3(%arg0: i32, %arg1: i32, %arg2: i32) -> (i32, i32) {
    %c0_i32 = arith.constant 0 : i32
    return %arg0, %arg1 : i32, i32
  }
  func.func @transform_4(%arg0: i32, %arg1: i32, %arg2: i32) -> (i32, i32) {
    %c0_i32 = arith.constant 0 : i32
    return %arg0, %arg1 : i32, i32
  }
}

module attributes {stable_mosaic.version = 11 : i64} {
  func.func @_mm_bn_kernel(%arg0: i32, %arg1: i32, %arg2: i32, %arg3: memref<16x128xbf16, #tpu.memory_space<vmem>>, %arg4: memref<128x128xbf16, #tpu.memory_space<vmem>>, %arg5: memref<1x128xf32, #tpu.memory_space<vmem>>, %arg6: memref<16x128xbf16, #tpu.memory_space<vmem>>, %arg7: memref<16x128xf32, #tpu.memory_space<vmem>>) attributes {dimension_semantics = [#tpu.dimension_semantics<parallel>, #tpu.dimension_semantics<parallel>, #tpu.dimension_semantics<arbitrary>], iteration_bounds = array<i64: 1, 1, 1>, scalar_prefetch = 0 : i64, scratch_operands = 1 : i64, tpu.core_type = #tpu.core_type<tc>, window_params = [{transform_indices = @transform_0, window_bounds = array<i64: 16, 128>}, {transform_indices = @transform_1, window_bounds = array<i64: 128, 128>}, {transform_indices = @transform_2, window_bounds = array<i64: 1, 128>}, {transform_indices = @transform_3, window_bounds = array<i64: 16, 128>}]} {
    %c0_i32 = arith.constant 0 : i32
    %0 = arith.cmpi eq, %arg2, %c0_i32 : i32
    %1 = arith.extui %0 : i1 to i32
    %c0_i32_0 = arith.constant 0 : i32
    %2 = arith.cmpi ne, %1, %c0_i32_0 : i32
    scf.if %2 {
      %cst_10 = arith.constant 0.000000e+00 : f32
      %12 = vector.broadcast %cst_10 : f32 to vector<16x128xf32>
      %c0_11 = arith.constant 0 : index
      %c0_12 = arith.constant 0 : index
      %13 = vector.load %arg7[%c0_11, %c0_12] : memref<16x128xf32, #tpu.memory_space<vmem>>, vector<16x128xf32>
      tpu.vector_store %arg7[%c0_11, %c0_12], %12 {strides = array<i32>} : memref<16x128xf32, #tpu.memory_space<vmem>>, vector<16x128xf32>,
    } else {
    }
    %c0 = arith.constant 0 : index
    %c0_1 = arith.constant 0 : index
    %3 = vector.load %arg7[%c0, %c0_1] : memref<16x128xf32, #tpu.memory_space<vmem>>, vector<16x128xf32>
    %c0_2 = arith.constant 0 : index
    %c0_3 = arith.constant 0 : index
    %4 = vector.load %arg3[%c0_2, %c0_3] : memref<16x128xbf16, #tpu.memory_space<vmem>>, vector<16x128xbf16>
    %c0_4 = arith.constant 0 : index
    %c0_5 = arith.constant 0 : index
    %5 = vector.load %arg4[%c0_4, %c0_5] : memref<128x128xbf16, #tpu.memory_space<vmem>>, vector<128x128xbf16>
    %cst = arith.constant dense<0.000000e+00> : vector<16x128xf32>
    %6 = tpu.matmul %4, %5, %cst {dimension_numbers = #tpu.dot_dimension_numbers<[1], [0], [0], [1], [0, 0, 1, 1], [], []>} : vector<16x128xbf16>, vector<128x128xbf16>, vector<16x128xf32> -> vector<16x128xf32>
    %7 = arith.addf %3, %6 : vector<16x128xf32>
    %c0_6 = arith.constant 0 : index
    %c0_7 = arith.constant 0 : index
    %8 = vector.load %arg7[%c0_6, %c0_7] : memref<16x128xf32, #tpu.memory_space<vmem>>, vector<16x128xf32>
    tpu.vector_store %arg7[%c0_6, %c0_7], %7 {strides = array<i32>} : memref<16x128xf32, #tpu.memory_space<vmem>>, vector<16x128xf32>,
    %c0_i32_8 = arith.constant 0 : i32
    %9 = arith.cmpi eq, %arg2, %c0_i32_8 : i32
    %10 = arith.extui %9 : i1 to i32
    %c0_i32_9 = arith.constant 0 : i32
    %11 = arith.cmpi ne, %10, %c0_i32_9 : i32
    scf.if %11 {
      %c0_10 = arith.constant 0 : index
      %c0_11 = arith.constant 0 : index
      %12 = vector.load %arg7[%c0_10, %c0_11] : memref<16x128xf32, #tpu.memory_space<vmem>>, vector<16x128xf32>
      %c0_12 = arith.constant 0 : index
      %c0_13 = arith.constant 0 : index
      %13 = vector.load %arg5[%c0_12, %c0_13] : memref<1x128xf32, #tpu.memory_space<vmem>>, vector<1x128xf32>
      %14 = vector.broadcast %13 : vector<1x128xf32> to vector<16x128xf32>
      %15 = arith.addf %12, %14 : vector<16x128xf32>
      %cst_14 = arith.constant 0.000000e+00 : f32
      %16 = vector.broadcast %cst_14 : f32 to vector<16x128xf32>
      %17 = arith.maximumf %15, %16 : vector<16x128xf32>
      %18 = arith.truncf %17 : vector<16x128xf32> to vector<16x128xbf16>
      %c0_15 = arith.constant 0 : index
      %c0_16 = arith.constant 0 : index
      %19 = vector.load %arg6[%c0_15, %c0_16] : memref<16x128xbf16, #tpu.memory_space<vmem>>, vector<16x128xbf16>
      tpu.vector_store %arg6[%c0_15, %c0_16], %18 {strides = array<i32>} : memref<16x128xbf16, #tpu.memory_space<vmem>>, vector<16x128xbf16>,
    } else {
    }
    return
  }
  func.func @transform_0(%arg0: i32, %arg1: i32, %arg2: i32) -> (i32, i32) {
    %c0_i32 = arith.constant 0 : i32
    return %arg0, %arg2 : i32, i32
  }
  func.func @transform_1(%arg0: i32, %arg1: i32, %arg2: i32) -> (i32, i32) {
    %c0_i32 = arith.constant 0 : i32
    return %arg2, %arg1 : i32, i32
  }
  func.func @transform_2(%arg0: i32, %arg1: i32, %arg2: i32) -> (i32, i32) {
    %c0_i32 = arith.constant 0 : i32
    %c0_i32_0 = arith.constant 0 : i32
    return %c0_i32, %arg1 : i32, i32
  }
  func.func @transform_3(%arg0: i32, %arg1: i32, %arg2: i32) -> (i32, i32) {
    %c0_i32 = arith.constant 0 : i32
    return %arg0, %arg1 : i32, i32
  }
}

module attributes {stable_mosaic.version = 11 : i64} {
  func.func @_mm_bn_kernel(%arg0: i32, %arg1: i32, %arg2: i32, %arg3: memref<16x128xbf16, #tpu.memory_space<vmem>>, %arg4: memref<128x128xbf16, #tpu.memory_space<vmem>>, %arg5: memref<1x128xf32, #tpu.memory_space<vmem>>, %arg6: memref<16x128xbf16, #tpu.memory_space<vmem>>, %arg7: memref<16x128xf32, #tpu.memory_space<vmem>>) attributes {dimension_semantics = [#tpu.dimension_semantics<parallel>, #tpu.dimension_semantics<parallel>, #tpu.dimension_semantics<arbitrary>], iteration_bounds = array<i64: 1, 1, 1>, scalar_prefetch = 0 : i64, scratch_operands = 1 : i64, tpu.core_type = #tpu.core_type<tc>, window_params = [{transform_indices = @transform_0, window_bounds = array<i64: 16, 128>}, {transform_indices = @transform_1, window_bounds = array<i64: 128, 128>}, {transform_indices = @transform_2, window_bounds = array<i64: 1, 128>}, {transform_indices = @transform_3, window_bounds = array<i64: 16, 128>}]} {
    %c0_i32 = arith.constant 0 : i32
    %0 = arith.cmpi eq, %arg2, %c0_i32 : i32
    %1 = arith.extui %0 : i1 to i32
    %c0_i32_0 = arith.constant 0 : i32
    %2 = arith.cmpi ne, %1, %c0_i32_0 : i32
    scf.if %2 {
      %cst_10 = arith.constant 0.000000e+00 : f32
      %12 = vector.broadcast %cst_10 : f32 to vector<16x128xf32>
      %c0_11 = arith.constant 0 : index
      %c0_12 = arith.constant 0 : index
      %13 = vector.load %arg7[%c0_11, %c0_12] : memref<16x128xf32, #tpu.memory_space<vmem>>, vector<16x128xf32>
      tpu.vector_store %arg7[%c0_11, %c0_12], %12 {strides = array<i32>} : memref<16x128xf32, #tpu.memory_space<vmem>>, vector<16x128xf32>,
    } else {
    }
    %c0 = arith.constant 0 : index
    %c0_1 = arith.constant 0 : index
    %3 = vector.load %arg7[%c0, %c0_1] : memref<16x128xf32, #tpu.memory_space<vmem>>, vector<16x128xf32>
    %c0_2 = arith.constant 0 : index
    %c0_3 = arith.constant 0 : index
    %4 = vector.load %arg3[%c0_2, %c0_3] : memref<16x128xbf16, #tpu.memory_space<vmem>>, vector<16x128xbf16>
    %c0_4 = arith.constant 0 : index
    %c0_5 = arith.constant 0 : index
    %5 = vector.load %arg4[%c0_4, %c0_5] : memref<128x128xbf16, #tpu.memory_space<vmem>>, vector<128x128xbf16>
    %cst = arith.constant dense<0.000000e+00> : vector<16x128xf32>
    %6 = tpu.matmul %4, %5, %cst {dimension_numbers = #tpu.dot_dimension_numbers<[1], [0], [0], [1], [0, 0, 1, 1], [], []>} : vector<16x128xbf16>, vector<128x128xbf16>, vector<16x128xf32> -> vector<16x128xf32>
    %7 = arith.addf %3, %6 : vector<16x128xf32>
    %c0_6 = arith.constant 0 : index
    %c0_7 = arith.constant 0 : index
    %8 = vector.load %arg7[%c0_6, %c0_7] : memref<16x128xf32, #tpu.memory_space<vmem>>, vector<16x128xf32>
    tpu.vector_store %arg7[%c0_6, %c0_7], %7 {strides = array<i32>} : memref<16x128xf32, #tpu.memory_space<vmem>>, vector<16x128xf32>,
    %c0_i32_8 = arith.constant 0 : i32
    %9 = arith.cmpi eq, %arg2, %c0_i32_8 : i32
    %10 = arith.extui %9 : i1 to i32
    %c0_i32_9 = arith.constant 0 : i32
    %11 = arith.cmpi ne, %10, %c0_i32_9 : i32
    scf.if %11 {
      %c0_10 = arith.constant 0 : index
      %c0_11 = arith.constant 0 : index
      %12 = vector.load %arg7[%c0_10, %c0_11] : memref<16x128xf32, #tpu.memory_space<vmem>>, vector<16x128xf32>
      %c0_12 = arith.constant 0 : index
      %c0_13 = arith.constant 0 : index
      %13 = vector.load %arg5[%c0_12, %c0_13] : memref<1x128xf32, #tpu.memory_space<vmem>>, vector<1x128xf32>
      %14 = vector.broadcast %13 : vector<1x128xf32> to vector<16x128xf32>
      %15 = arith.addf %12, %14 : vector<16x128xf32>
      %16 = arith.truncf %15 : vector<16x128xf32> to vector<16x128xbf16>
      %c0_14 = arith.constant 0 : index
      %c0_15 = arith.constant 0 : index
      %17 = vector.load %arg6[%c0_14, %c0_15] : memref<16x128xbf16, #tpu.memory_space<vmem>>, vector<16x128xbf16>
      tpu.vector_store %arg6[%c0_14, %c0_15], %16 {strides = array<i32>} : memref<16x128xbf16, #tpu.memory_space<vmem>>, vector<16x128xbf16>,
    } else {
    }
    return
  }
  func.func @transform_0(%arg0: i32, %arg1: i32, %arg2: i32) -> (i32, i32) {
    %c0_i32 = arith.constant 0 : i32
    return %arg0, %arg2 : i32, i32
  }
  func.func @transform_1(%arg0: i32, %arg1: i32, %arg2: i32) -> (i32, i32) {
    %c0_i32 = arith.constant 0 : i32
    return %arg2, %arg1 : i32, i32
  }
  func.func @transform_2(%arg0: i32, %arg1: i32, %arg2: i32) -> (i32, i32) {
    %c0_i32 = arith.constant 0 : i32
    %c0_i32_0 = arith.constant 0 : i32
    return %c0_i32, %arg1 : i32, i32
  }
  func.func @transform_3(%arg0: i32, %arg1: i32, %arg2: i32) -> (i32, i32) {
    %c0_i32 = arith.constant 0 : i32
    return %arg0, %arg1 : i32, i32
  }
}

module attributes {stable_mosaic.version = 11 : i64} {
  func.func @_mm_bn_combine_kernel(%arg0: i32, %arg1: i32, %arg2: i32, %arg3: memref<16x128xbf16, #tpu.memory_space<vmem>>, %arg4: memref<128x128xbf16, #tpu.memory_space<vmem>>, %arg5: memref<1x128xf32, #tpu.memory_space<vmem>>, %arg6: memref<16x128xbf16, #tpu.memory_space<vmem>>, %arg7: memref<16x128xbf16, #tpu.memory_space<vmem>>, %arg8: memref<16x128xf32, #tpu.memory_space<vmem>>) attributes {dimension_semantics = [#tpu.dimension_semantics<parallel>, #tpu.dimension_semantics<parallel>, #tpu.dimension_semantics<arbitrary>], iteration_bounds = array<i64: 1, 1, 1>, scalar_prefetch = 0 : i64, scratch_operands = 1 : i64, tpu.core_type = #tpu.core_type<tc>, window_params = [{transform_indices = @transform_0, window_bounds = array<i64: 16, 128>}, {transform_indices = @transform_1, window_bounds = array<i64: 128, 128>}, {transform_indices = @transform_2, window_bounds = array<i64: 1, 128>}, {transform_indices = @transform_3, window_bounds = array<i64: 16, 128>}, {transform_indices = @transform_4, window_bounds = array<i64: 16, 128>}]} {
    %c0_i32 = arith.constant 0 : i32
    %0 = arith.cmpi eq, %arg2, %c0_i32 : i32
    %1 = arith.extui %0 : i1 to i32
    %c0_i32_0 = arith.constant 0 : i32
    %2 = arith.cmpi ne, %1, %c0_i32_0 : i32
    scf.if %2 {
      %cst_10 = arith.constant 0.000000e+00 : f32
      %12 = vector.broadcast %cst_10 : f32 to vector<16x128xf32>
      %c0_11 = arith.constant 0 : index
      %c0_12 = arith.constant 0 : index
      %13 = vector.load %arg8[%c0_11, %c0_12] : memref<16x128xf32, #tpu.memory_space<vmem>>, vector<16x128xf32>
      tpu.vector_store %arg8[%c0_11, %c0_12], %12 {strides = array<i32>} : memref<16x128xf32, #tpu.memory_space<vmem>>, vector<16x128xf32>,
    } else {
    }
    %c0 = arith.constant 0 : index
    %c0_1 = arith.constant 0 : index
    %3 = vector.load %arg8[%c0, %c0_1] : memref<16x128xf32, #tpu.memory_space<vmem>>, vector<16x128xf32>
    %c0_2 = arith.constant 0 : index
    %c0_3 = arith.constant 0 : index
    %4 = vector.load %arg3[%c0_2, %c0_3] : memref<16x128xbf16, #tpu.memory_space<vmem>>, vector<16x128xbf16>
    %c0_4 = arith.constant 0 : index
    %c0_5 = arith.constant 0 : index
    %5 = vector.load %arg4[%c0_4, %c0_5] : memref<128x128xbf16, #tpu.memory_space<vmem>>, vector<128x128xbf16>
    %cst = arith.constant dense<0.000000e+00> : vector<16x128xf32>
    %6 = tpu.matmul %4, %5, %cst {dimension_numbers = #tpu.dot_dimension_numbers<[1], [0], [0], [1], [0, 0, 1, 1], [], []>} : vector<16x128xbf16>, vector<128x128xbf16>, vector<16x128xf32> -> vector<16x128xf32>
    %7 = arith.addf %3, %6 : vector<16x128xf32>
    %c0_6 = arith.constant 0 : index
    %c0_7 = arith.constant 0 : index
    %8 = vector.load %arg8[%c0_6, %c0_7] : memref<16x128xf32, #tpu.memory_space<vmem>>, vector<16x128xf32>
    tpu.vector_store %arg8[%c0_6, %c0_7], %7 {strides = array<i32>} : memref<16x128xf32, #tpu.memory_space<vmem>>, vector<16x128xf32>,
    %c0_i32_8 = arith.constant 0 : i32
    %9 = arith.cmpi eq, %arg2, %c0_i32_8 : i32
    %10 = arith.extui %9 : i1 to i32
    %c0_i32_9 = arith.constant 0 : i32
    %11 = arith.cmpi ne, %10, %c0_i32_9 : i32
    scf.if %11 {
      %c0_10 = arith.constant 0 : index
      %c0_11 = arith.constant 0 : index
      %12 = vector.load %arg8[%c0_10, %c0_11] : memref<16x128xf32, #tpu.memory_space<vmem>>, vector<16x128xf32>
      %c0_12 = arith.constant 0 : index
      %c0_13 = arith.constant 0 : index
      %13 = vector.load %arg5[%c0_12, %c0_13] : memref<1x128xf32, #tpu.memory_space<vmem>>, vector<1x128xf32>
      %14 = vector.broadcast %13 : vector<1x128xf32> to vector<16x128xf32>
      %15 = arith.addf %12, %14 : vector<16x128xf32>
      %c0_14 = arith.constant 0 : index
      %c0_15 = arith.constant 0 : index
      %16 = vector.load %arg6[%c0_14, %c0_15] : memref<16x128xbf16, #tpu.memory_space<vmem>>, vector<16x128xbf16>
      %17 = arith.extf %16 : vector<16x128xbf16> to vector<16x128xf32>
      %cst_16 = arith.constant 1.000000e+00 : f32
      %18 = vector.broadcast %cst_16 : f32 to vector<16x128xf32>
      %19 = arith.mulf %18, %15 : vector<16x128xf32>
      %cst_17 = arith.constant 1.000000e+00 : f32
      %20 = vector.broadcast %cst_17 : f32 to vector<16x128xf32>
      %21 = arith.mulf %20, %17 : vector<16x128xf32>
      %22 = arith.addf %19, %21 : vector<16x128xf32>
      %cst_18 = arith.constant 0.000000e+00 : f32
      %23 = vector.broadcast %cst_18 : f32 to vector<16x128xf32>
      %24 = arith.maximumf %22, %23 : vector<16x128xf32>
      %25 = arith.truncf %24 : vector<16x128xf32> to vector<16x128xbf16>
      %c0_19 = arith.constant 0 : index
      %c0_20 = arith.constant 0 : index
      %26 = vector.load %arg7[%c0_19, %c0_20] : memref<16x128xbf16, #tpu.memory_space<vmem>>, vector<16x128xbf16>
      tpu.vector_store %arg7[%c0_19, %c0_20], %25 {strides = array<i32>} : memref<16x128xbf16, #tpu.memory_space<vmem>>, vector<16x128xbf16>,
    } else {
    }
    return
  }
  func.func @transform_0(%arg0: i32, %arg1: i32, %arg2: i32) -> (i32, i32) {
    %c0_i32 = arith.constant 0 : i32
    return %arg0, %arg2 : i32, i32
  }
  func.func @transform_1(%arg0: i32, %arg1: i32, %arg2: i32) -> (i32, i32) {
    %c0_i32 = arith.constant 0 : i32
    return %arg2, %arg1 : i32, i32
  }
  func.func @transform_2(%arg0: i32, %arg1: i32, %arg2: i32) -> (i32, i32) {
    %c0_i32 = arith.constant 0 : i32
    %c0_i32_0 = arith.constant 0 : i32
    return %c0_i32, %arg1 : i32, i32
  }
  func.func @transform_3(%arg0: i32, %arg1: i32, %arg2: i32) -> (i32, i32) {
    %c0_i32 = arith.constant 0 : i32
    return %arg0, %arg1 : i32, i32
  }
  func.func @transform_4(%arg0: i32, %arg1: i32, %arg2: i32) -> (i32, i32) {
    %c0_i32 = arith.constant 0 : i32
    return %arg0, %arg1 : i32, i32
  }
}

module attributes {stable_mosaic.version = 11 : i64} {
  func.func @_mean_fc_kernel(%arg0: i32, %arg1: memref<8x4x32xbf16, #tpu.memory_space<vmem>>, %arg2: memref<32x128xbf16, #tpu.memory_space<vmem>>, %arg3: memref<1x128xf32, #tpu.memory_space<vmem>>, %arg4: memref<8x128xf32, #tpu.memory_space<vmem>>) attributes {dimension_semantics = [#tpu.dimension_semantics<parallel>], iteration_bounds = array<i64: 1>, scalar_prefetch = 0 : i64, scratch_operands = 0 : i64, tpu.core_type = #tpu.core_type<tc>, window_params = [{transform_indices = @transform_0, window_bounds = array<i64: 8, 4, 32>}, {pipeline_mode = #tpu.pipeline_mode<synchronous>, transform_indices = @transform_1, window_bounds = array<i64: 32, 128>}, {pipeline_mode = #tpu.pipeline_mode<synchronous>, transform_indices = @transform_2, window_bounds = array<i64: 1, 128>}, {transform_indices = @transform_3, window_bounds = array<i64: 8, 128>}]} {
    %c0 = arith.constant 0 : index
    %c0_0 = arith.constant 0 : index
    %c0_1 = arith.constant 0 : index
    %0 = vector.load %arg1[%c0, %c0_0, %c0_1] : memref<8x4x32xbf16, #tpu.memory_space<vmem>>, vector<8x4x32xbf16>
    %1 = arith.extf %0 : vector<8x4x32xbf16> to vector<8x4x32xf32>
    %cst = arith.constant dense<0.000000e+00> : vector<8x32xf32>
    %2 = vector.multi_reduction <add>, %1, %cst [1] : vector<8x4x32xf32> to vector<8x32xf32>
    %cst_2 = arith.constant 4.000000e+00 : f32
    %3 = vector.broadcast %cst_2 : f32 to vector<8x32xf32>
    %4 = arith.divf %2, %3 : vector<8x32xf32>
    %5 = arith.truncf %4 : vector<8x32xf32> to vector<8x32xbf16>
    %c0_3 = arith.constant 0 : index
    %c0_4 = arith.constant 0 : index
    %6 = vector.load %arg2[%c0_3, %c0_4] : memref<32x128xbf16, #tpu.memory_space<vmem>>, vector<32x128xbf16>
    %cst_5 = arith.constant dense<0.000000e+00> : vector<8x128xf32>
    %7 = tpu.matmul %5, %6, %cst_5 {dimension_numbers = #tpu.dot_dimension_numbers<[1], [0], [0], [1], [0, 0, 1, 1], [], []>} : vector<8x32xbf16>, vector<32x128xbf16>, vector<8x128xf32> -> vector<8x128xf32>
    %c0_6 = arith.constant 0 : index
    %c0_7 = arith.constant 0 : index
    %8 = vector.load %arg3[%c0_6, %c0_7] : memref<1x128xf32, #tpu.memory_space<vmem>>, vector<1x128xf32>
    %9 = vector.broadcast %8 : vector<1x128xf32> to vector<8x128xf32>
    %10 = arith.addf %7, %9 : vector<8x128xf32>
    %c0_8 = arith.constant 0 : index
    %c0_9 = arith.constant 0 : index
    %11 = vector.load %arg4[%c0_8, %c0_9] : memref<8x128xf32, #tpu.memory_space<vmem>>, vector<8x128xf32>
    tpu.vector_store %arg4[%c0_8, %c0_9], %10 {strides = array<i32>} : memref<8x128xf32, #tpu.memory_space<vmem>>, vector<8x128xf32>,
    return
  }
  func.func @transform_0(%arg0: i32) -> (i32, i32, i32) {
    %c0_i32 = arith.constant 0 : i32
    %c0_i32_0 = arith.constant 0 : i32
    %c0_i32_1 = arith.constant 0 : i32
    return %arg0, %c0_i32, %c0_i32_0 : i32, i32, i32
  }
  func.func @transform_1(%arg0: i32) -> (i32, i32) {
    %c0_i32 = arith.constant 0 : i32
    %c0_i32_0 = arith.constant 0 : i32
    %c0_i32_1 = arith.constant 0 : i32
    return %c0_i32, %c0_i32_0 : i32, i32
  }
  func.func @transform_2(%arg0: i32) -> (i32, i32) {
    %c0_i32 = arith.constant 0 : i32
    %c0_i32_0 = arith.constant 0 : i32
    %c0_i32_1 = arith.constant 0 : i32
    return %c0_i32, %c0_i32_0 : i32, i32
  }
  func.func @transform_3(%arg0: i32) -> (i32, i32) {
    %c0_i32 = arith.constant 0 : i32
    %c0_i32_0 = arith.constant 0 : i32
    return %arg0, %c0_i32 : i32, i32
  }
}

</mosaic_0001>

<llo_original>
// kernel: resnet_forward.10
$region0: #{resnet_forward.10}
  #allocation0 [shape = 'u32[]', space=smem, size = 0x4, offset = 0x4, fixed_abs, tag = 'smem constant byte address 0x4 - core index']
  #allocation1 [shape = 'u32[144,128]{1,0:T(1,128)}', space=vmem, size = 0x12000, scoped, tag = 'internal scratch']
  #allocation2 [shape = 'f32[32,128]{1,0:T(8,128)}', space=vmem, size = 0x4000, scoped, tag = 'scratch operand']
  %s0 = inlined_call_operand.vmem [shape: bf16[32,128], index: 0, kind: input, shape index: {}]
  %s1 = inlined_call_operand.vmem [shape: bf16[128,128], index: 1, kind: input, shape index: {}]
  %s2 = inlined_call_operand.vmem [shape: f32[1,128], index: 2, kind: input, shape index: {}]
  %s3 = inlined_call_operand.vmem [shape: bf16[32,128], index: 3, kind: output, shape index: {}]
  %s4 = sld [smem:[#allocation0]]
  $region30: #{resnet_forward.10} parent=0
    _
  %s6 = ssub.s32 1, %s4
  %s7 = scalar_select 0, %s6, %s4
  // Predicated region
  $region2: #{resnet_forward.10} parent=0 // pred_check
    _
  $region3: #{resnet_forward.10} parent=0 // pred_check_branch
    %9 = sbr.rel (0) target = $region5
  $region4: #{resnet_forward.10} parent=0 // pred_region
    _
  $region5: #{resnet_forward.10} parent=0 // pred_fallthru
    _
  // Predicated region
  $region6: #{resnet_forward.10} parent=0 // pred_check
    _
  $region7: #{resnet_forward.10} parent=0 // pred_check_branch
    %11 = sbr.rel (0) target = $region9
  $region8: #{resnet_forward.10} parent=0 // pred_region
    _
  $region9: #{resnet_forward.10} parent=0 // pred_fallthru
    _
  // Predicated region
  $region10: #{resnet_forward.10} parent=0 // pred_check
    _
  $region11: #{resnet_forward.10} parent=0 // pred_check_branch
    %13 = sbr.rel (0) target = $region13
  $region12: #{resnet_forward.10} parent=0 // pred_region
    _
  $region13: #{resnet_forward.10} parent=0 // pred_fallthru
    _
  %p15 = scmp.eq.s32.totalorder 0, 0
  // Predicated region
  $region14: #{resnet_forward.10} parent=0 // pred_check
    %p16 = pneg %p15
  $region15: #{resnet_forward.10} parent=0 // pred_check_branch
    %18 = sbr.rel (%p16) target = $region17
  $region16: #{resnet_forward.10} parent=0 // pred_region
    %19 = vst [vmem:[#allocation2] sm:$0xff] 0.0
    %20 = vst [vmem:[#allocation2 + $0x8] sm:$0xff] 0.0
    %21 = vst [vmem:[#allocation2 + $0x10] sm:$0xff] 0.0
    %22 = vst [vmem:[#allocation2 + $0x18] sm:$0xff] 0.0
  $region17: #{resnet_forward.10} parent=0 // pred_fallthru
    _
  %v23 = vld [vmem:[#allocation2] sm:$0xff]
  %v24 = vld [vmem:[#allocation2 + $0x8] sm:$0xff]
  %v25 = vld [vmem:[#allocation2 + $0x10] sm:$0xff]
  %v26 = vld [vmem:[#allocation2 + $0x18] sm:$0xff]
  %v27 = vld [vmem:[%s0] sm:$0xf]
  %v28 = vld [vmem:[%s0 + $0x4] sm:$0xf]
  %v29 = vld [vmem:[%s0 + $0x8] sm:$0xf]
  %v30 = vld [vmem:[%s0 + $0xc] sm:$0xf]
  %v31 = vld [vmem:[%s1] sm:$0xf]
  %v32 = vld [vmem:[%s1 + $0x4] sm:$0xf]
  %v33 = vld [vmem:[%s1 + $0x8] sm:$0xf]
  %v34 = vld [vmem:[%s1 + $0xc] sm:$0xf]
  %v35 = vld [vmem:[%s1 + $0x10] sm:$0xf]
  %v36 = vld [vmem:[%s1 + $0x14] sm:$0xf]
  %v37 = vld [vmem:[%s1 + $0x18] sm:$0xf]
  %v38 = vld [vmem:[%s1 + $0x1c] sm:$0xf]
  %v39 = vld [vmem:[%s1 + $0x20] sm:$0xf]
  %v40 = vld [vmem:[%s1 + $0x24] sm:$0xf]
  %v41 = vld [vmem:[%s1 + $0x28] sm:$0xf]
  %v42 = vld [vmem:[%s1 + $0x2c] sm:$0xf]
  %v43 = vld [vmem:[%s1 + $0x30] sm:$0xf]
  %v44 = vld [vmem:[%s1 + $0x34] sm:$0xf]
  %v45 = vld [vmem:[%s1 + $0x38] sm:$0xf]
  %v46 = vld [vmem:[%s1 + $0x3c] sm:$0xf]
  %v51 = vunpack.c.l.b16 %v27
  %v52 = vunpack.c.l.b16 %v28
  %v53 = vunpack.c.l.b16 %v29
  %v54 = vunpack.c.l.b16 %v30
  %v55 = vpack.c.b16 %v52, %v51
  %v56 = vpack.c.b16 %v54, %v53
  %v75 = vunpack.c.l.b16 %v31
  %v76 = vunpack.c.l.b16 %v32
  %v77 = vunpack.c.l.b16 %v33
  %v78 = vunpack.c.l.b16 %v34
  %v79 = vunpack.c.l.b16 %v35
  %v80 = vunpack.c.l.b16 %v36
  %v81 = vunpack.c.l.b16 %v37
  %v82 = vunpack.c.l.b16 %v38
  %v83 = vunpack.c.l.b16 %v39
  %v84 = vunpack.c.l.b16 %v40
  %v85 = vunpack.c.l.b16 %v41
  %v86 = vunpack.c.l.b16 %v42
  %v87 = vunpack.c.l.b16 %v43
  %v88 = vunpack.c.l.b16 %v44
  %v89 = vunpack.c.l.b16 %v45
  %v90 = vunpack.c.l.b16 %v46
  %v91 = vpack.c.b16 %v76, %v75
  %v92 = vpack.c.b16 %v78, %v77
  %v93 = vpack.c.b16 %v80, %v79
  %v94 = vpack.c.b16 %v82, %v81
  %v95 = vpack.c.b16 %v84, %v83
  %v96 = vpack.c.b16 %v86, %v85
  %v97 = vpack.c.b16 %v88, %v87
  %v98 = vpack.c.b16 %v90, %v89
  %107 = vmatprep.subr.bf16.mxu0 0
  %108 = vmatpush1.bf16.msra.mxu0 %v91
  %109 = vmatprep.subr.bf16.mxu0 0
  %110 = vmatpush1.bf16.msra.mxu0 %v92
  %111 = vmatprep.subr.bf16.mxu0 0
  %112 = vmatpush1.bf16.msra.mxu0 %v93
  %113 = vmatprep.subr.bf16.mxu0 0
  %114 = vmatpush1.bf16.msra.mxu0 %v94
  %115 = vmatprep.subr.bf16.mxu0 0
  %116 = vmatpush1.bf16.msra.mxu0 %v95
  %117 = vmatprep.subr.bf16.mxu0 0
  %118 = vmatpush1.bf16.msra.mxu0 %v96
  %119 = vmatprep.subr.bf16.mxu0 0
  %120 = vmatpush1.bf16.msra.mxu0 %v97
  %121 = vmatprep.subr.bf16.mxu0 0
  %122 = vmatpush1.bf16.msra.mxu0 %v98
  %123 = vmatprep.subr.bf16.mxu0 0
  %124 = vmatpush1.bf16.msra.mxu0 0
  %125 = vmatprep.subr.bf16.mxu0 0
  %126 = vmatpush1.bf16.msra.mxu0 0
  %127 = vmatprep.subr.bf16.mxu0 0
  %128 = vmatpush1.bf16.msra.mxu0 0
  %129 = vmatprep.subr.bf16.mxu0 0
  %130 = vmatpush1.bf16.msra.mxu0 0
  %131 = vmatprep.subr.bf16.mxu0 0
  %132 = vmatpush1.bf16.msra.mxu0 0
  %133 = vmatprep.subr.bf16.mxu0 0
  %134 = vmatpush1.bf16.msra.mxu0 0
  %135 = vmatprep.subr.bf16.mxu0 0
  %136 = vmatpush1.bf16.msra.mxu0 0
  %137 = vmatprep.subr.bf16.mxu0 0
  %138 = vmatpush1.bf16.msra.mxu0 0
  %139 = vmatprep.mubr.bf16.mxu0 0
  %140 = vmatmul.mubr.bf16.gmra.mrb[0].mxu0 %v55
  %v141 = vpop.f32.mrb[0].mxu0
  %v142 = vadd.f32 0.0, %v141
  %v143 = vpop.f32.mrb[0].mxu0
  %v144 = vpop.f32.mrb[0].mxu0
  %v145 = vadd.f32 0.0, %v144
  %v146 = vpop.f32.mrb[0].mxu0
  %147 = vmatprep.mubr.bf16.mxu0 0
  %148 = vmatmul.mubr.bf16.gmra.mrb[0].mxu0 %v56
  %v149 = vpop.f32.mrb[0].mxu0
  %v150 = vadd.f32 0.0, %v149
  %v151 = vpop.f32.mrb[0].mxu0
  %v152 = vpop.f32.mrb[0].mxu0
  %v153 = vadd.f32 0.0, %v152
  %v154 = vpop.f32.mrb[0].mxu0
  %155 = vdwg.mxu0
  %v156 = vadd.f32 %v23, %v142
  %v157 = vadd.f32 %v24, %v145
  %v158 = vadd.f32 %v25, %v150
  %v159 = vadd.f32 %v26, %v153
  %160 = vst [vmem:[#allocation2] sm:$0xff] %v156
  %161 = vst [vmem:[#allocation2 + $0x8] sm:$0xff] %v157
  %162 = vst [vmem:[#allocation2 + $0x10] sm:$0xff] %v158
  %163 = vst [vmem:[#allocation2 + $0x18] sm:$0xff] %v159
  // Predicated region
  $region18: #{resnet_forward.10} parent=0 // pred_check
    %p164 = pneg %p15
  $region19: #{resnet_forward.10} parent=0 // pred_check_branch
    %166 = sbr.rel (%p164) target = $region21
  $region20: #{resnet_forward.10} parent=0 // pred_region
    %v167 = vld [vmem:[#allocation2] sm:$0xff]
    %v168 = vld [vmem:[#allocation2 + $0x8] sm:$0xff]
    %v169 = vld [vmem:[#allocation2 + $0x10] sm:$0xff]
    %v170 = vld [vmem:[#allocation2 + $0x18] sm:$0xff]
    %v171 = vld [vmem:[%s2] sm:$0x1]
    %v173 = vlaneseq
    %v174 = vshrl.u32 %v173, 7
    %v175 = vsub.s32 0, %v174
    %v176 = vrot.slane %v171, %v175
    %v178 = vadd.f32 %v167, %v176
    %v179 = vadd.f32 %v168, %v176
    %v180 = vadd.f32 %v169, %v176
    %v181 = vadd.f32 %v170, %v176
    %v182 = vmax.f32 %v178, 0.0
    %v183 = vmax.f32 %v179, 0.0
    %v184 = vmax.f32 %v180, 0.0
    %v185 = vmax.f32 %v181, 0.0
    %v186 = vpack.c.bf16 %v183, %v182
    %v187 = vpack.c.bf16 %v185, %v184
    %v190 = vunpack.c.l.b16 %v186
    %v191 = vunpack.c.h.b16 %v186
    %v192 = vunpack.c.l.b16 %v187
    %v193 = vunpack.c.h.b16 %v187
    %v194 = vpack.c.b16 %v190, %v190
    %v195 = vpack.c.b16 %v191, %v191
    %v196 = vpack.c.b16 %v192, %v192
    %v197 = vpack.c.b16 %v193, %v193
    %202 = vst [vmem:[%s3] sm:$0xf] %v194
    %203 = vst [vmem:[%s3 + $0x4] sm:$0xf] %v195
    %204 = vst [vmem:[%s3 + $0x8] sm:$0xf] %v196
    %205 = vst [vmem:[%s3 + $0xc] sm:$0xf] %v197
  $region21: #{resnet_forward.10} parent=0 // pred_fallthru
    _
  // Predicated region
  $region22: #{resnet_forward.10} parent=0 // pred_check
    _
  $region23: #{resnet_forward.10} parent=0 // pred_check_branch
    %207 = sbr.rel (0) target = $region25
  $region24: #{resnet_forward.10} parent=0 // pred_region
    _
  $region25: #{resnet_forward.10} parent=0 // pred_fallthru
    _
  // Predicated region
  $region26: #{resnet_forward.10} parent=0 // pred_check
    _
  $region27: #{resnet_forward.10} parent=0 // pred_check_branch
    %209 = sbr.rel (0) target = $region29
  $region28: #{resnet_forward.10} parent=0 // pred_region
    _
  $region29: #{resnet_forward.10} parent=0 // pred_fallthru
    _

// kernel: resnet_forward.9
$region0: #{resnet_forward.9}
  #allocation0 [shape = 'u32[]', space=smem, size = 0x4, offset = 0x4, fixed_abs, tag = 'smem constant byte address 0x4 - core index']
  #allocation1 [shape = 'u32[144,128]{1,0:T(1,128)}', space=vmem, size = 0x12000, scoped, tag = 'internal scratch']
  #allocation2 [shape = 'f32[128,128]{1,0:T(8,128)}', space=vmem, size = 0x10000, scoped, tag = 'scratch operand']
  %s0 = inlined_call_operand.vmem [shape: bf16[128,256], index: 0, kind: input, shape index: {}]
  %s1 = inlined_call_operand.vmem [shape: bf16[256,128], index: 1, kind: input, shape index: {}]
  %s2 = inlined_call_operand.vmem [shape: f32[1,128], index: 2, kind: input, shape index: {}]
  %s3 = inlined_call_operand.vmem [shape: bf16[128,128], index: 3, kind: output, shape index: {}]
  %s4 = sld [smem:[#allocation0]]
  $region30: #{resnet_forward.9} parent=0
    _
  %s6 = ssub.s32 1, %s4
  %s7 = scalar_select 0, %s6, %s4
  // Predicated region
  $region2: #{resnet_forward.9} parent=0 // pred_check
    _
  $region3: #{resnet_forward.9} parent=0 // pred_check_branch
    %9 = sbr.rel (0) target = $region5
  $region4: #{resnet_forward.9} parent=0 // pred_region
    _
  $region5: #{resnet_forward.9} parent=0 // pred_fallthru
    _
  // Predicated region
  $region6: #{resnet_forward.9} parent=0 // pred_check
    _
  $region7: #{resnet_forward.9} parent=0 // pred_check_branch
    %11 = sbr.rel (0) target = $region9
  $region8: #{resnet_forward.9} parent=0 // pred_region
    _
  $region9: #{resnet_forward.9} parent=0 // pred_fallthru
    _
  // Predicated region
  $region10: #{resnet_forward.9} parent=0 // pred_check
    _
  $region11: #{resnet_forward.9} parent=0 // pred_check_branch
    %13 = sbr.rel (0) target = $region13
  $region12: #{resnet_forward.9} parent=0 // pred_region
    _
  $region13: #{resnet_forward.9} parent=0 // pred_fallthru
    _
  %p15 = scmp.eq.s32.totalorder 0, 0
  // Predicated region
  $region14: #{resnet_forward.9} parent=0 // pred_check
    %p16 = pneg %p15
  $region15: #{resnet_forward.9} parent=0 // pred_check_branch
    %18 = sbr.rel (%p16) target = $region17
  $region16: #{resnet_forward.9} parent=0 // pred_region
    %19 = vst [vmem:[#allocation2] sm:$0xff] 0.0
    %20 = vst [vmem:[#allocation2 + $0x8] sm:$0xff] 0.0
    %21 = vst [vmem:[#allocation2 + $0x10] sm:$0xff] 0.0
    %22 = vst [vmem:[#allocation2 + $0x18] sm:$0xff] 0.0
    %23 = vst [vmem:[#allocation2 + $0x20] sm:$0xff] 0.0
    %24 = vst [vmem:[#allocation2 + $0x28] sm:$0xff] 0.0
    %25 = vst [vmem:[#allocation2 + $0x30] sm:$0xff] 0.0
    %26 = vst [vmem:[#allocation2 + $0x38] sm:$0xff] 0.0
    %27 = vst [vmem:[#allocation2 + $0x40] sm:$0xff] 0.0
    %28 = vst [vmem:[#allocation2 + $0x48] sm:$0xff] 0.0
    %29 = vst [vmem:[#allocation2 + $0x50] sm:$0xff] 0.0
    %30 = vst [vmem:[#allocation2 + $0x58] sm:$0xff] 0.0
    %31 = vst [vmem:[#allocation2 + $0x60] sm:$0xff] 0.0
    %32 = vst [vmem:[#allocation2 + $0x68] sm:$0xff] 0.0
    %33 = vst [vmem:[#allocation2 + $0x70] sm:$0xff] 0.0
    %34 = vst [vmem:[#allocation2 + $0x78] sm:$0xff] 0.0
  $region17: #{resnet_forward.9} parent=0 // pred_fallthru
    _
  %v35 = vld [vmem:[#allocation2] sm:$0xff]
  %v36 = vld [vmem:[#allocation2 + $0x8] sm:$0xff]
  %v37 = vld [vmem:[#allocation2 + $0x10] sm:$0xff]
  %v38 = vld [vmem:[#allocation2 + $0x18] sm:$0xff]
  %v39 = vld [vmem:[#allocation2 + $0x20] sm:$0xff]
  %v40 = vld [vmem:[#allocation2 + $0x28] sm:$0xff]
  %v41 = vld [vmem:[#allocation2 + $0x30] sm:$0xff]
  %v42 = vld [vmem:[#allocation2 + $0x38] sm:$0xff]
  %v43 = vld [vmem:[#allocation2 + $0x40] sm:$0xff]
  %v44 = vld [vmem:[#allocation2 + $0x48] sm:$0xff]
  %v45 = vld [vmem:[#allocation2 + $0x50] sm:$0xff]
  %v46 = vld [vmem:[#allocation2 + $0x58] sm:$0xff]
  %v47 = vld [vmem:[#allocation2 + $0x60] sm:$0xff]
  %v48 = vld [vmem:[#allocation2 + $0x68] sm:$0xff]
  %v49 = vld [vmem:[#allocation2 + $0x70] sm:$0xff]
  %v50 = vld [vmem:[#allocation2 + $0x78] sm:$0xff]
  %v51 = vld [vmem:[%s0] sm:$0xff]
  %v52 = vld [vmem:[%s0 + $0x8] sm:$0xff]
  %v53 = vld [vmem:[%s0 + $0x10] sm:$0xff]
  %v54 = vld [vmem:[%s0 + $0x18] sm:$0xff]
  %v55 = vld [vmem:[%s0 + $0x20] sm:$0xff]
  %v56 = vld [vmem:[%s0 + $0x28] sm:$0xff]
  %v57 = vld [vmem:[%s0 + $0x30] sm:$0xff]
  %v58 = vld [vmem:[%s0 + $0x38] sm:$0xff]
  %v59 = vld [vmem:[%s0 + $0x40] sm:$0xff]
  %v60 = vld [vmem:[%s0 + $0x48] sm:$0xff]
  %v61 = vld [vmem:[%s0 + $0x50] sm:$0xff]
  %v62 = vld [vmem:[%s0 + $0x58] sm:$0xff]
  %v63 = vld [vmem:[%s0 + $0x60] sm:$0xff]
  %v64 = vld [vmem:[%s0 + $0x68] sm:$0xff]
  %v65 = vld [vmem:[%s0 + $0x70] sm:$0xff]
  %v66 = vld [vmem:[%s0 + $0x78] sm:$0xff]
  %v67 = vld [vmem:[%s1] sm:$0xf]
  %v68 = vld [vmem:[%s1 + $0x4] sm:$0xf]
  %v69 = vld [vmem:[%s1 + $0x8] sm:$0xf]
  %v70 = vld [vmem:[%s1 + $0xc] sm:$0xf]
  %v71 = vld [vmem:[%s1 + $0x10] sm:$0xf]
  %v72 = vld [vmem:[%s1 + $0x14] sm:$0xf]
  %v73 = vld [vmem:[%s1 + $0x18] sm:$0xf]
  %v74 = vld [vmem:[%s1 + $0x1c] sm:$0xf]
  %v75 = vld [vmem:[%s1 + $0x20] sm:$0xf]
  %v76 = vld [vmem:[%s1 + $0x24] sm:$0xf]
  %v77 = vld [vmem:[%s1 + $0x28] sm:$0xf]
  %v78 = vld [vmem:[%s1 + $0x2c] sm:$0xf]
  %v79 = vld [vmem:[%s1 + $0x30] sm:$0xf]
  %v80 = vld [vmem:[%s1 + $0x34] sm:$0xf]
  %v81 = vld [vmem:[%s1 + $0x38] sm:$0xf]
  %v82 = vld [vmem:[%s1 + $0x3c] sm:$0xf]
  %v83 = vld [vmem:[%s1 + $0x40] sm:$0xf]
  %v84 = vld [vmem:[%s1 + $0x44] sm:$0xf]
  %v85 = vld [vmem:[%s1 + $0x48] sm:$0xf]
  %v86 = vld [vmem:[%s1 + $0x4c] sm:$0xf]
  %v87 = vld [vmem:[%s1 + $0x50] sm:$0xf]
  %v88 = vld [vmem:[%s1 + $0x54] sm:$0xf]
  %v89 = vld [vmem:[%s1 + $0x58] sm:$0xf]
  %v90 = vld [vmem:[%s1 + $0x5c] sm:$0xf]
  %v91 = vld [vmem:[%s1 + $0x60] sm:$0xf]
  %v92 = vld [vmem:[%s1 + $0x64] sm:$0xf]
  %v93 = vld [vmem:[%s1 + $0x68] sm:$0xf]
  %v94 = vld [vmem:[%s1 + $0x6c] sm:$0xf]
  %v95 = vld [vmem:[%s1 + $0x70] sm:$0xf]
  %v96 = vld [vmem:[%s1 + $0x74] sm:$0xf]
  %v97 = vld [vmem:[%s1 + $0x78] sm:$0xf]
  %v98 = vld [vmem:[%s1 + $0x7c] sm:$0xf]
  %v115 = vunpack.c.l.b16 %v51
  %v116 = vunpack.c.h.b16 %v51
  %v117 = vunpack.c.l.b16 %v52
  %v118 = vunpack.c.h.b16 %v52
  %v119 = vunpack.c.l.b16 %v53
  %v120 = vunpack.c.h.b16 %v53
  %v121 = vunpack.c.l.b16 %v54
  %v122 = vunpack.c.h.b16 %v54
  %v123 = vunpack.c.l.b16 %v55
  %v124 = vunpack.c.h.b16 %v55
  %v125 = vunpack.c.l.b16 %v56
  %v126 = vunpack.c.h.b16 %v56
  %v127 = vunpack.c.l.b16 %v57
  %v128 = vunpack.c.h.b16 %v57
  %v129 = vunpack.c.l.b16 %v58
  %v130 = vunpack.c.h.b16 %v58
  %v131 = vunpack.c.l.b16 %v59
  %v132 = vunpack.c.h.b16 %v59
  %v133 = vunpack.c.l.b16 %v60
  %v134 = vunpack.c.h.b16 %v60
  %v135 = vunpack.c.l.b16 %v61
  %v136 = vunpack.c.h.b16 %v61
  %v137 = vunpack.c.l.b16 %v62
  %v138 = vunpack.c.h.b16 %v62
  %v139 = vunpack.c.l.b16 %v63
  %v140 = vunpack.c.h.b16 %v63
  %v141 = vunpack.c.l.b16 %v64
  %v142 = vunpack.c.h.b16 %v64
  %v143 = vunpack.c.l.b16 %v65
  %v144 = vunpack.c.h.b16 %v65
  %v145 = vunpack.c.l.b16 %v66
  %v146 = vunpack.c.h.b16 %v66
  %v147 = vpack.c.b16 %v117, %v115
  %v148 = vpack.c.b16 %v118, %v116
  %v149 = vpack.c.b16 %v121, %v119
  %v150 = vpack.c.b16 %v122, %v120
  %v151 = vpack.c.b16 %v125, %v123
  %v152 = vpack.c.b16 %v126, %v124
  %v153 = vpack.c.b16 %v129, %v127
  %v154 = vpack.c.b16 %v130, %v128
  %v155 = vpack.c.b16 %v133, %v131
  %v156 = vpack.c.b16 %v134, %v132
  %v157 = vpack.c.b16 %v137, %v135
  %v158 = vpack.c.b16 %v138, %v136
  %v159 = vpack.c.b16 %v141, %v139
  %v160 = vpack.c.b16 %v142, %v140
  %v161 = vpack.c.b16 %v145, %v143
  %v162 = vpack.c.b16 %v146, %v144
  %v211 = vunpack.c.l.b16 %v67
  %v212 = vunpack.c.l.b16 %v68
  %v213 = vunpack.c.l.b16 %v69
  %v214 = vunpack.c.l.b16 %v70
  %v215 = vunpack.c.l.b16 %v71
  %v216 = vunpack.c.l.b16 %v72
  %v217 = vunpack.c.l.b16 %v73
  %v218 = vunpack.c.l.b16 %v74
  %v219 = vunpack.c.l.b16 %v75
  %v220 = vunpack.c.l.b16 %v76
  %v221 = vunpack.c.l.b16 %v77
  %v222 = vunpack.c.l.b16 %v78
  %v223 = vunpack.c.l.b16 %v79
  %v224 = vunpack.c.l.b16 %v80
  %v225 = vunpack.c.l.b16 %v81
  %v226 = vunpack.c.l.b16 %v82
  %v227 = vunpack.c.l.b16 %v83
  %v228 = vunpack.c.l.b16 %v84
  %v229 = vunpack.c.l.b16 %v85
  %v230 = vunpack.c.l.b16 %v86
  %v231 = vunpack.c.l.b16 %v87
  %v232 = vunpack.c.l.b16 %v88
  %v233 = vunpack.c.l.b16 %v89
  %v234 = vunpack.c.l.b16 %v90
  %v235 = vunpack.c.l.b16 %v91
  %v236 = vunpack.c.l.b16 %v92
  %v237 = vunpack.c.l.b16 %v93
  %v238 = vunpack.c.l.b16 %v94
  %v239 = vunpack.c.l.b16 %v95
  %v240 = vunpack.c.l.b16 %v96
  %v241 = vunpack.c.l.b16 %v97
  %v242 = vunpack.c.l.b16 %v98
  %v243 = vpack.c.b16 %v212, %v211
  %v244 = vpack.c.b16 %v214, %v213
  %v245 = vpack.c.b16 %v216, %v215
  %v246 = vpack.c.b16 %v218, %v217
  %v247 = vpack.c.b16 %v220, %v219
  %v248 = vpack.c.b16 %v222, %v221
  %v249 = vpack.c.b16 %v224, %v223
  %v250 = vpack.c.b16 %v226, %v225
  %v251 = vpack.c.b16 %v228, %v227
  %v252 = vpack.c.b16 %v230, %v229
  %v253 = vpack.c.b16 %v232, %v231
  %v254 = vpack.c.b16 %v234, %v233
  %v255 = vpack.c.b16 %v236, %v235
  %v256 = vpack.c.b16 %v238, %v237
  %v257 = vpack.c.b16 %v240, %v239
  %v258 = vpack.c.b16 %v242, %v241
  %275 = vmatprep.subr.bf16.mxu0 0
  %276 = vmatpush1.bf16.msra.mxu0 %v243
  %277 = vmatprep.subr.bf16.mxu0 0
  %278 = vmatpush1.bf16.msra.mxu0 %v244
  %279 = vmatprep.subr.bf16.mxu0 0
  %280 = vmatpush1.bf16.msra.mxu0 %v245
  %281 = vmatprep.subr.bf16.mxu0 0
  %282 = vmatpush1.bf16.msra.mxu0 %v246
  %283 = vmatprep.subr.bf16.mxu0 0
  %284 = vmatpush1.bf16.msra.mxu0 %v247
  %285 = vmatprep.subr.bf16.mxu0 0
  %286 = vmatpush1.bf16.msra.mxu0 %v248
  %287 = vmatprep.subr.bf16.mxu0 0
  %288 = vmatpush1.bf16.msra.mxu0 %v249
  %289 = vmatprep.subr.bf16.mxu0 0
  %290 = vmatpush1.bf16.msra.mxu0 %v250
  %291 = vmatprep.subr.bf16.mxu0 0
  %292 = vmatpush1.bf16.msra.mxu0 %v251
  %293 = vmatprep.subr.bf16.mxu0 0
  %294 = vmatpush1.bf16.msra.mxu0 %v252
  %295 = vmatprep.subr.bf16.mxu0 0
  %296 = vmatpush1.bf16.msra.mxu0 %v253
  %297 = vmatprep.subr.bf16.mxu0 0
  %298 = vmatpush1.bf16.msra.mxu0 %v254
  %299 = vmatprep.subr.bf16.mxu0 0
  %300 = vmatpush1.bf16.msra.mxu0 %v255
  %301 = vmatprep.subr.bf16.mxu0 0
  %302 = vmatpush1.bf16.msra.mxu0 %v256
  %303 = vmatprep.subr.bf16.mxu0 0
  %304 = vmatpush1.bf16.msra.mxu0 %v257
  %305 = vmatprep.subr.bf16.mxu0 0
  %306 = vmatpush1.bf16.msra.mxu0 %v258
  %307 = vmatprep.mubr.bf16.mxu0 %v148
  %308 = vmatmul.mubr.bf16.gmra.mrb[0].mxu0 %v147
  %v309 = vpop.f32.mrb[0].mxu0
  %v310 = vadd.f32 0.0, %v309
  %v311 = vpop.f32.mrb[0].mxu0
  %v312 = vpop.f32.mrb[0].mxu0
  %v313 = vadd.f32 0.0, %v312
  %v314 = vpop.f32.mrb[0].mxu0
  %315 = vmatprep.mubr.bf16.mxu0 %v150
  %316 = vmatmul.mubr.bf16.gmra.mrb[0].mxu0 %v149
  %v317 = vpop.f32.mrb[0].mxu0
  %v318 = vadd.f32 0.0, %v317
  %v319 = vpop.f32.mrb[0].mxu0
  %v320 = vpop.f32.mrb[0].mxu0
  %v321 = vadd.f32 0.0, %v320
  %v322 = vpop.f32.mrb[0].mxu0
  %323 = vmatprep.mubr.bf16.mxu0 %v152
  %324 = vmatmul.mubr.bf16.gmra.mrb[0].mxu0 %v151
  %v325 = vpop.f32.mrb[0].mxu0
  %v326 = vadd.f32 0.0, %v325
  %v327 = vpop.f32.mrb[0].mxu0
  %v328 = vpop.f32.mrb[0].mxu0
  %v329 = vadd.f32 0.0, %v328
  %v330 = vpop.f32.mrb[0].mxu0
  %331 = vmatprep.mubr.bf16.mxu0 %v154
  %332 = vmatmul.mubr.bf16.gmra.mrb[0].mxu0 %v153
  %v333 = vpop.f32.mrb[0].mxu0
  %v334 = vadd.f32 0.0, %v333
  %v335 = vpop.f32.mrb[0].mxu0
  %v336 = vpop.f32.mrb[0].mxu0
  %v337 = vadd.f32 0.0, %v336
  %v338 = vpop.f32.mrb[0].mxu0
  %339 = vmatprep.mubr.bf16.mxu0 %v156
  %340 = vmatmul.mubr.bf16.gmra.mrb[0].mxu0 %v155
  %v341 = vpop.f32.mrb[0].mxu0
  %v342 = vadd.f32 0.0, %v341
  %v343 = vpop.f32.mrb[0].mxu0
  %v344 = vpop.f32.mrb[0].mxu0
  %v345 = vadd.f32 0.0, %v344
  %v346 = vpop.f32.mrb[0].mxu0
  %347 = vmatprep.mubr.bf16.mxu0 %v158
  %348 = vmatmul.mubr.bf16.gmra.mrb[0].mxu0 %v157
  %v349 = vpop.f32.mrb[0].mxu0
  %v350 = vadd.f32 0.0, %v349
  %v351 = vpop.f32.mrb[0].mxu0
  %v352 = vpop.f32.mrb[0].mxu0
  %v353 = vadd.f32 0.0, %v352
  %v354 = vpop.f32.mrb[0].mxu0
  %355 = vmatprep.mubr.bf16.mxu0 %v160
  %356 = vmatmul.mubr.bf16.gmra.mrb[0].mxu0 %v159
  %v357 = vpop.f32.mrb[0].mxu0
  %v358 = vadd.f32 0.0, %v357
  %v359 = vpop.f32.mrb[0].mxu0
  %v360 = vpop.f32.mrb[0].mxu0
  %v361 = vadd.f32 0.0, %v360
  %v362 = vpop.f32.mrb[0].mxu0
  %363 = vmatprep.mubr.bf16.mxu0 %v162
  %364 = vmatmul.mubr.bf16.gmra.mrb[0].mxu0 %v161
  %v365 = vpop.f32.mrb[0].mxu0
  %v366 = vadd.f32 0.0, %v365
  %v367 = vpop.f32.mrb[0].mxu0
  %v368 = vpop.f32.mrb[0].mxu0
  %v369 = vadd.f32 0.0, %v368
  %v370 = vpop.f32.mrb[0].mxu0
  %371 = vdwg.mxu0
  %v372 = vadd.f32 %v35, %v310
  %v373 = vadd.f32 %v36, %v313
  %v374 = vadd.f32 %v37, %v318
  %v375 = vadd.f32 %v38, %v321
  %v376 = vadd.f32 %v39, %v326
  %v377 = vadd.f32 %v40, %v329
  %v378 = vadd.f32 %v41, %v334
  %v379 = vadd.f32 %v42, %v337
  %v380 = vadd.f32 %v43, %v342
  %v381 = vadd.f32 %v44, %v345
  %v382 = vadd.f32 %v45, %v350
  %v383 = vadd.f32 %v46, %v353
  %v384 = vadd.f32 %v47, %v358
  %v385 = vadd.f32 %v48, %v361
  %v386 = vadd.f32 %v49, %v366
  %v387 = vadd.f32 %v50, %v369
  %388 = vst [vmem:[#allocation2] sm:$0xff] %v372
  %389 = vst [vmem:[#allocation2 + $0x8] sm:$0xff] %v373
  %390 = vst [vmem:[#allocation2 + $0x10] sm:$0xff] %v374
  %391 = vst [vmem:[#allocation2 + $0x18] sm:$0xff] %v375
  %392 = vst [vmem:[#allocation2 + $0x20] sm:$0xff] %v376
  %393 = vst [vmem:[#allocation2 + $0x28] sm:$0xff] %v377
  %394 = vst [vmem:[#allocation2 + $0x30] sm:$0xff] %v378
  %395 = vst [vmem:[#allocation2 + $0x38] sm:$0xff] %v379
  %396 = vst [vmem:[#allocation2 + $0x40] sm:$0xff] %v380
  %397 = vst [vmem:[#allocation2 + $0x48] sm:$0xff] %v381
  %398 = vst [vmem:[#allocation2 + $0x50] sm:$0xff] %v382
  %399 = vst [vmem:[#allocation2 + $0x58] sm:$0xff] %v383
  %400 = vst [vmem:[#allocation2 + $0x60] sm:$0xff] %v384
  %401 = vst [vmem:[#allocation2 + $0x68] sm:$0xff] %v385
  %402 = vst [vmem:[#allocation2 + $0x70] sm:$0xff] %v386
  %403 = vst [vmem:[#allocation2 + $0x78] sm:$0xff] %v387
  // Predicated region
  $region18: #{resnet_forward.9} parent=0 // pred_check
    %p404 = pneg %p15
  $region19: #{resnet_forward.9} parent=0 // pred_check_branch
    %406 = sbr.rel (%p404) target = $region21
  $region20: #{resnet_forward.9} parent=0 // pred_region
    %v407 = vld [vmem:[#allocation2] sm:$0xff]
    %v408 = vld [vmem:[#allocation2 + $0x8] sm:$0xff]
    %v409 = vld [vmem:[#allocation2 + $0x10] sm:$0xff]
    %v410 = vld [vmem:[#allocation2 + $0x18] sm:$0xff]
    %v411 = vld [vmem:[#allocation2 + $0x20] sm:$0xff]
    %v412 = vld [vmem:[#allocation2 + $0x28] sm:$0xff]
    %v413 = vld [vmem:[#allocation2 + $0x30] sm:$0xff]
    %v414 = vld [vmem:[#allocation2 + $0x38] sm:$0xff]
    %v415 = vld [vmem:[#allocation2 + $0x40] sm:$0xff]
    %v416 = vld [vmem:[#allocation2 + $0x48] sm:$0xff]
    %v417 = vld [vmem:[#allocation2 + $0x50] sm:$0xff]
    %v418 = vld [vmem:[#allocation2 + $0x58] sm:$0xff]
    %v419 = vld [vmem:[#allocation2 + $0x60] sm:$0xff]
    %v420 = vld [vmem:[#allocation2 + $0x68] sm:$0xff]
    %v421 = vld [vmem:[#allocation2 + $0x70] sm:$0xff]
    %v422 = vld [vmem:[#allocation2 + $0x78] sm:$0xff]
    %v423 = vld [vmem:[%s2] sm:$0x1]
    %v425 = vlaneseq
    %v426 = vshrl.u32 %v425, 7
    %v427 = vsub.s32 0, %v426
    %v428 = vrot.slane %v423, %v427
    %v430 = vadd.f32 %v407, %v428
    %v431 = vadd.f32 %v408, %v428
    %v432 = vadd.f32 %v409, %v428
    %v433 = vadd.f32 %v410, %v428
    %v434 = vadd.f32 %v411, %v428
    %v435 = vadd.f32 %v412, %v428
    %v436 = vadd.f32 %v413, %v428
    %v437 = vadd.f32 %v414, %v428
    %v438 = vadd.f32 %v415, %v428
    %v439 = vadd.f32 %v416, %v428
    %v440 = vadd.f32 %v417, %v428
    %v441 = vadd.f32 %v418, %v428
    %v442 = vadd.f32 %v419, %v428
    %v443 = vadd.f32 %v420, %v428
    %v444 = vadd.f32 %v421, %v428
    %v445 = vadd.f32 %v422, %v428
    %v446 = vmax.f32 %v430, 0.0
    %v447 = vmax.f32 %v431, 0.0
    %v448 = vmax.f32 %v432, 0.0
    %v449 = vmax.f32 %v433, 0.0
    %v450 = vmax.f32 %v434, 0.0
    %v451 = vmax.f32 %v435, 0.0
    %v452 = vmax.f32 %v436, 0.0
    %v453 = vmax.f32 %v437, 0.0
    %v454 = vmax.f32 %v438, 0.0
    %v455 = vmax.f32 %v439, 0.0
    %v456 = vmax.f32 %v440, 0.0
    %v457 = vmax.f32 %v441, 0.0
    %v458 = vmax.f32 %v442, 0.0
    %v459 = vmax.f32 %v443, 0.0
    %v460 = vmax.f32 %v444, 0.0
    %v461 = vmax.f32 %v445, 0.0
    %v462 = vpack.c.bf16 %v447, %v446
    %v463 = vpack.c.bf16 %v449, %v448
    %v464 = vpack.c.bf16 %v451, %v450
    %v465 = vpack.c.bf16 %v453, %v452
    %v466 = vpack.c.bf16 %v455, %v454
    %v467 = vpack.c.bf16 %v457, %v456
    %v468 = vpack.c.bf16 %v459, %v458
    %v469 = vpack.c.bf16 %v461, %v460
    %v478 = vunpack.c.l.b16 %v462
    %v479 = vunpack.c.h.b16 %v462
    %v480 = vunpack.c.l.b16 %v463
    %v481 = vunpack.c.h.b16 %v463
    %v482 = vunpack.c.l.b16 %v464
    %v483 = vunpack.c.h.b16 %v464
    %v484 = vunpack.c.l.b16 %v465
    %v485 = vunpack.c.h.b16 %v465
    %v486 = vunpack.c.l.b16 %v466
    %v487 = vunpack.c.h.b16 %v466
    %v488 = vunpack.c.l.b16 %v467
    %v489 = vunpack.c.h.b16 %v467
    %v490 = vunpack.c.l.b16 %v468
    %v491 = vunpack.c.h.b16 %v468
    %v492 = vunpack.c.l.b16 %v469
    %v493 = vunpack.c.h.b16 %v469
    %v494 = vpack.c.b16 %v478, %v478
    %v495 = vpack.c.b16 %v479, %v479
    %v496 = vpack.c.b16 %v480, %v480
    %v497 = vpack.c.b16 %v481, %v481
    %v498 = vpack.c.b16 %v482, %v482
    %v499 = vpack.c.b16 %v483, %v483
    %v500 = vpack.c.b16 %v484, %v484
    %v501 = vpack.c.b16 %v485, %v485
    %v502 = vpack.c.b16 %v486, %v486
    %v503 = vpack.c.b16 %v487, %v487
    %v504 = vpack.c.b16 %v488, %v488
    %v505 = vpack.c.b16 %v489, %v489
    %v506 = vpack.c.b16 %v490, %v490
    %v507 = vpack.c.b16 %v491, %v491
    %v508 = vpack.c.b16 %v492, %v492
    %v509 = vpack.c.b16 %v493, %v493
    %526 = vst [vmem:[%s3] sm:$0xf] %v494
    %527 = vst [vmem:[%s3 + $0x4] sm:$0xf] %v495
    %528 = vst [vmem:[%s3 + $0x8] sm:$0xf] %v496
    %529 = vst [vmem:[%s3 + $0xc] sm:$0xf] %v497
    %530 = vst [vmem:[%s3 + $0x10] sm:$0xf] %v498
    %531 = vst [vmem:[%s3 + $0x14] sm:$0xf] %v499
    %532 = vst [vmem:[%s3 + $0x18] sm:$0xf] %v500
    %533 = vst [vmem:[%s3 + $0x1c] sm:$0xf] %v501
    %534 = vst [vmem:[%s3 + $0x20] sm:$0xf] %v502
    %535 = vst [vmem:[%s3 + $0x24] sm:$0xf] %v503
    %536 = vst [vmem:[%s3 + $0x28] sm:$0xf] %v504
    %537 = vst [vmem:[%s3 + $0x2c] sm:$0xf] %v505
    %538 = vst [vmem:[%s3 + $0x30] sm:$0xf] %v506
    %539 = vst [vmem:[%s3 + $0x34] sm:$0xf] %v507
    %540 = vst [vmem:[%s3 + $0x38] sm:$0xf] %v508
    %541 = vst [vmem:[%s3 + $0x3c] sm:$0xf] %v509
  $region21: #{resnet_forward.9} parent=0 // pred_fallthru
    _
  // Predicated region
  $region22: #{resnet_forward.9} parent=0 // pred_check
    _
  $region23: #{resnet_forward.9} parent=0 // pred_check_branch
    %543 = sbr.rel (0) target = $region25
  $region24: #{resnet_forward.9} parent=0 // pred_region
    _
  $region25: #{resnet_forward.9} parent=0 // pred_fallthru
    _
  // Predicated region
  $region26: #{resnet_forward.9} parent=0 // pred_check
    _
  $region27: #{resnet_forward.9} parent=0 // pred_check_branch
    %545 = sbr.rel (0) target = $region29
  $region28: #{resnet_forward.9} parent=0 // pred_region
    _
  $region29: #{resnet_forward.9} parent=0 // pred_fallthru
    _

// kernel: resnet_forward.12
$region0: #{resnet_forward.12}
  #allocation0 [shape = 'u32[]', space=smem, size = 0x4, offset = 0x4, fixed_abs, tag = 'smem constant byte address 0x4 - core index']
  #allocation1 [shape = 'u32[144,128]{1,0:T(1,128)}', space=vmem, size = 0x12000, scoped, tag = 'internal scratch']
  #allocation2 [shape = 'f32[32,128]{1,0:T(8,128)}', space=vmem, size = 0x4000, scoped, tag = 'scratch operand']
  %s0 = inlined_call_operand.vmem [shape: bf16[32,128], index: 0, kind: input, shape index: {}]
  %s1 = inlined_call_operand.vmem [shape: bf16[128,128], index: 1, kind: input, shape index: {}]
  %s2 = inlined_call_operand.vmem [shape: f32[1,128], index: 2, kind: input, shape index: {}]
  %s3 = inlined_call_operand.vmem [shape: bf16[32,128], index: 3, kind: input, shape index: {}]
  %s4 = inlined_call_operand.vmem [shape: bf16[32,128], index: 4, kind: output, shape index: {}]
  %s5 = sld [smem:[#allocation0]]
  $region34: #{resnet_forward.12} parent=0
    _
  %s7 = ssub.s32 1, %s5
  %s8 = scalar_select 0, %s7, %s5
  // Predicated region
  $region2: #{resnet_forward.12} parent=0 // pred_check
    _
  $region3: #{resnet_forward.12} parent=0 // pred_check_branch
    %10 = sbr.rel (0) target = $region5
  $region4: #{resnet_forward.12} parent=0 // pred_region
    _
  $region5: #{resnet_forward.12} parent=0 // pred_fallthru
    _
  // Predicated region
  $region6: #{resnet_forward.12} parent=0 // pred_check
    _
  $region7: #{resnet_forward.12} parent=0 // pred_check_branch
    %12 = sbr.rel (0) target = $region9
  $region8: #{resnet_forward.12} parent=0 // pred_region
    _
  $region9: #{resnet_forward.12} parent=0 // pred_fallthru
    _
  // Predicated region
  $region10: #{resnet_forward.12} parent=0 // pred_check
    _
  $region11: #{resnet_forward.12} parent=0 // pred_check_branch
    %14 = sbr.rel (0) target = $region13
  $region12: #{resnet_forward.12} parent=0 // pred_region
    _
  $region13: #{resnet_forward.12} parent=0 // pred_fallthru
    _
  // Predicated region
  $region14: #{resnet_forward.12} parent=0 // pred_check
    _
  $region15: #{resnet_forward.12} parent=0 // pred_check_branch
    %16 = sbr.rel (0) target = $region17
  $region16: #{resnet_forward.12} parent=0 // pred_region
    _
  $region17: #{resnet_forward.12} parent=0 // pred_fallthru
    _
  %p18 = scmp.eq.s32.totalorder 0, 0
  // Predicated region
  $region18: #{resnet_forward.12} parent=0 // pred_check
    %p19 = pneg %p18
  $region19: #{resnet_forward.12} parent=0 // pred_check_branch
    %21 = sbr.rel (%p19) target = $region21
  $region20: #{resnet_forward.12} parent=0 // pred_region
    %22 = vst [vmem:[#allocation2] sm:$0xff] 0.0
    %23 = vst [vmem:[#allocation2 + $0x8] sm:$0xff] 0.0
    %24 = vst [vmem:[#allocation2 + $0x10] sm:$0xff] 0.0
    %25 = vst [vmem:[#allocation2 + $0x18] sm:$0xff] 0.0
  $region21: #{resnet_forward.12} parent=0 // pred_fallthru
    _
  %v26 = vld [vmem:[#allocation2] sm:$0xff]
  %v27 = vld [vmem:[#allocation2 + $0x8] sm:$0xff]
  %v28 = vld [vmem:[#allocation2 + $0x10] sm:$0xff]
  %v29 = vld [vmem:[#allocation2 + $0x18] sm:$0xff]
  %v30 = vld [vmem:[%s0] sm:$0xf]
  %v31 = vld [vmem:[%s0 + $0x4] sm:$0xf]
  %v32 = vld [vmem:[%s0 + $0x8] sm:$0xf]
  %v33 = vld [vmem:[%s0 + $0xc] sm:$0xf]
  %v34 = vld [vmem:[%s1] sm:$0xf]
  %v35 = vld [vmem:[%s1 + $0x4] sm:$0xf]
  %v36 = vld [vmem:[%s1 + $0x8] sm:$0xf]
  %v37 = vld [vmem:[%s1 + $0xc] sm:$0xf]
  %v38 = vld [vmem:[%s1 + $0x10] sm:$0xf]
  %v39 = vld [vmem:[%s1 + $0x14] sm:$0xf]
  %v40 = vld [vmem:[%s1 + $0x18] sm:$0xf]
  %v41 = vld [vmem:[%s1 + $0x1c] sm:$0xf]
  %v42 = vld [vmem:[%s1 + $0x20] sm:$0xf]
  %v43 = vld [vmem:[%s1 + $0x24] sm:$0xf]
  %v44 = vld [vmem:[%s1 + $0x28] sm:$0xf]
  %v45 = vld [vmem:[%s1 + $0x2c] sm:$0xf]
  %v46 = vld [vmem:[%s1 + $0x30] sm:$0xf]
  %v47 = vld [vmem:[%s1 + $0x34] sm:$0xf]
  %v48 = vld [vmem:[%s1 + $0x38] sm:$0xf]
  %v49 = vld [vmem:[%s1 + $0x3c] sm:$0xf]
  %v54 = vunpack.c.l.b16 %v30
  %v55 = vunpack.c.l.b16 %v31
  %v56 = vunpack.c.l.b16 %v32
  %v57 = vunpack.c.l.b16 %v33
  %v58 = vpack.c.b16 %v55, %v54
  %v59 = vpack.c.b16 %v57, %v56
  %v78 = vunpack.c.l.b16 %v34
  %v79 = vunpack.c.l.b16 %v35
  %v80 = vunpack.c.l.b16 %v36
  %v81 = vunpack.c.l.b16 %v37
  %v82 = vunpack.c.l.b16 %v38
  %v83 = vunpack.c.l.b16 %v39
  %v84 = vunpack.c.l.b16 %v40
  %v85 = vunpack.c.l.b16 %v41
  %v86 = vunpack.c.l.b16 %v42
  %v87 = vunpack.c.l.b16 %v43
  %v88 = vunpack.c.l.b16 %v44
  %v89 = vunpack.c.l.b16 %v45
  %v90 = vunpack.c.l.b16 %v46
  %v91 = vunpack.c.l.b16 %v47
  %v92 = vunpack.c.l.b16 %v48
  %v93 = vunpack.c.l.b16 %v49
  %v94 = vpack.c.b16 %v79, %v78
  %v95 = vpack.c.b16 %v81, %v80
  %v96 = vpack.c.b16 %v83, %v82
  %v97 = vpack.c.b16 %v85, %v84
  %v98 = vpack.c.b16 %v87, %v86
  %v99 = vpack.c.b16 %v89, %v88
  %v100 = vpack.c.b16 %v91, %v90
  %v101 = vpack.c.b16 %v93, %v92
  %110 = vmatprep.subr.bf16.mxu0 0
  %111 = vmatpush1.bf16.msra.mxu0 %v94
  %112 = vmatprep.subr.bf16.mxu0 0
  %113 = vmatpush1.bf16.msra.mxu0 %v95
  %114 = vmatprep.subr.bf16.mxu0 0
  %115 = vmatpush1.bf16.msra.mxu0 %v96
  %116 = vmatprep.subr.bf16.mxu0 0
  %117 = vmatpush1.bf16.msra.mxu0 %v97
  %118 = vmatprep.subr.bf16.mxu0 0
  %119 = vmatpush1.bf16.msra.mxu0 %v98
  %120 = vmatprep.subr.bf16.mxu0 0
  %121 = vmatpush1.bf16.msra.mxu0 %v99
  %122 = vmatprep.subr.bf16.mxu0 0
  %123 = vmatpush1.bf16.msra.mxu0 %v100
  %124 = vmatprep.subr.bf16.mxu0 0
  %125 = vmatpush1.bf16.msra.mxu0 %v101
  %126 = vmatprep.subr.bf16.mxu0 0
  %127 = vmatpush1.bf16.msra.mxu0 0
  %128 = vmatprep.subr.bf16.mxu0 0
  %129 = vmatpush1.bf16.msra.mxu0 0
  %130 = vmatprep.subr.bf16.mxu0 0
  %131 = vmatpush1.bf16.msra.mxu0 0
  %132 = vmatprep.subr.bf16.mxu0 0
  %133 = vmatpush1.bf16.msra.mxu0 0
  %134 = vmatprep.subr.bf16.mxu0 0
  %135 = vmatpush1.bf16.msra.mxu0 0
  %136 = vmatprep.subr.bf16.mxu0 0
  %137 = vmatpush1.bf16.msra.mxu0 0
  %138 = vmatprep.subr.bf16.mxu0 0
  %139 = vmatpush1.bf16.msra.mxu0 0
  %140 = vmatprep.subr.bf16.mxu0 0
  %141 = vmatpush1.bf16.msra.mxu0 0
  %142 = vmatprep.mubr.bf16.mxu0 0
  %143 = vmatmul.mubr.bf16.gmra.mrb[0].mxu0 %v58
  %v144 = vpop.f32.mrb[0].mxu0
  %v145 = vadd.f32 0.0, %v144
  %v146 = vpop.f32.mrb[0].mxu0
  %v147 = vpop.f32.mrb[0].mxu0
  %v148 = vadd.f32 0.0, %v147
  %v149 = vpop.f32.mrb[0].mxu0
  %150 = vmatprep.mubr.bf16.mxu0 0
  %151 = vmatmul.mubr.bf16.gmra.mrb[0].mxu0 %v59
  %v152 = vpop.f32.mrb[0].mxu0
  %v153 = vadd.f32 0.0, %v152
  %v154 = vpop.f32.mrb[0].mxu0
  %v155 = vpop.f32.mrb[0].mxu0
  %v156 = vadd.f32 0.0, %v155
  %v157 = vpop.f32.mrb[0].mxu0
  %158 = vdwg.mxu0
  %v159 = vadd.f32 %v26, %v145
  %v160 = vadd.f32 %v27, %v148
  %v161 = vadd.f32 %v28, %v153
  %v162 = vadd.f32 %v29, %v156
  %163 = vst [vmem:[#allocation2] sm:$0xff] %v159
  %164 = vst [vmem:[#allocation2 + $0x8] sm:$0xff] %v160
  %165 = vst [vmem:[#allocation2 + $0x10] sm:$0xff] %v161
  %166 = vst [vmem:[#allocation2 + $0x18] sm:$0xff] %v162
  // Predicated region
  $region22: #{resnet_forward.12} parent=0 // pred_check
    %p167 = pneg %p18
  $region23: #{resnet_forward.12} parent=0 // pred_check_branch
    %169 = sbr.rel (%p167) target = $region25
  $region24: #{resnet_forward.12} parent=0 // pred_region
    %v170 = vld [vmem:[#allocation2] sm:$0xff]
    %v171 = vld [vmem:[#allocation2 + $0x8] sm:$0xff]
    %v172 = vld [vmem:[#allocation2 + $0x10] sm:$0xff]
    %v173 = vld [vmem:[#allocation2 + $0x18] sm:$0xff]
    %v174 = vld [vmem:[%s2] sm:$0x1]
    %v176 = vlaneseq
    %v177 = vshrl.u32 %v176, 7
    %v178 = vsub.s32 0, %v177
    %v179 = vrot.slane %v174, %v178
    %v181 = vadd.f32 %v170, %v179
    %v182 = vadd.f32 %v171, %v179
    %v183 = vadd.f32 %v172, %v179
    %v184 = vadd.f32 %v173, %v179
    %v185 = vld [vmem:[%s3] sm:$0xf]
    %v186 = vld [vmem:[%s3 + $0x4] sm:$0xf]
    %v187 = vld [vmem:[%s3 + $0x8] sm:$0xf]
    %v188 = vld [vmem:[%s3 + $0xc] sm:$0xf]
    %v189 = vunpack.c.l.bf16 %v185
    %v190 = vunpack.c.l.bf16 %v186
    %v191 = vunpack.c.l.bf16 %v187
    %v192 = vunpack.c.l.bf16 %v188
    %v193 = vadd.f32 %v181, %v189
    %v194 = vadd.f32 %v182, %v190
    %v195 = vadd.f32 %v183, %v191
    %v196 = vadd.f32 %v184, %v192
    %v197 = vmax.f32 %v193, 0.0
    %v198 = vmax.f32 %v194, 0.0
    %v199 = vmax.f32 %v195, 0.0
    %v200 = vmax.f32 %v196, 0.0
    %v201 = vpack.c.bf16 %v198, %v197
    %v202 = vpack.c.bf16 %v200, %v199
    %v205 = vunpack.c.l.b16 %v201
    %v206 = vunpack.c.h.b16 %v201
    %v207 = vunpack.c.l.b16 %v202
    %v208 = vunpack.c.h.b16 %v202
    %v209 = vpack.c.b16 %v205, %v205
    %v210 = vpack.c.b16 %v206, %v206
    %v211 = vpack.c.b16 %v207, %v207
    %v212 = vpack.c.b16 %v208, %v208
    %217 = vst [vmem:[%s4] sm:$0xf] %v209
    %218 = vst [vmem:[%s4 + $0x4] sm:$0xf] %v210
    %219 = vst [vmem:[%s4 + $0x8] sm:$0xf] %v211
    %220 = vst [vmem:[%s4 + $0xc] sm:$0xf] %v212
  $region25: #{resnet_forward.12} parent=0 // pred_fallthru
    _
  // Predicated region
  $region26: #{resnet_forward.12} parent=0 // pred_check
    _
  $region27: #{resnet_forward.12} parent=0 // pred_check_branch
    %222 = sbr.rel (0) target = $region29
  $region28: #{resnet_forward.12} parent=0 // pred_region
    _
  $region29: #{resnet_forward.12} parent=0 // pred_fallthru
    _
  // Predicated region
  $region30: #{resnet_forward.12} parent=0 // pred_check
    _
  $region31: #{resnet_forward.12} parent=0 // pred_check_branch
    %224 = sbr.rel (0) target = $region33
  $region32: #{resnet_forward.12} parent=0 // pred_region
    _
  $region33: #{resnet_forward.12} parent=0 // pred_fallthru
    _

// kernel: resnet_forward.14
$region0: #{resnet_forward.14}
  #allocation0 [shape = 'u32[]', space=smem, size = 0x4, offset = 0x4, fixed_abs, tag = 'smem constant byte address 0x4 - core index']
  #allocation1 [shape = 'u32[144,128]{1,0:T(1,128)}', space=vmem, size = 0x12000, scoped, tag = 'internal scratch']
  #allocation2 [shape = 'f32[16,128]{1,0:T(8,128)}', space=vmem, size = 0x2000, scoped, tag = 'scratch operand']
  %s0 = inlined_call_operand.vmem [shape: bf16[16,128], index: 0, kind: input, shape index: {}]
  %s1 = inlined_call_operand.vmem [shape: bf16[128,128], index: 1, kind: input, shape index: {}]
  %s2 = inlined_call_operand.vmem [shape: f32[1,128], index: 2, kind: input, shape index: {}]
  %s3 = inlined_call_operand.vmem [shape: bf16[16,128], index: 3, kind: output, shape index: {}]
  %s4 = sld [smem:[#allocation0]]
  $region30: #{resnet_forward.14} parent=0
    _
  %s6 = ssub.s32 1, %s4
  %s7 = scalar_select 0, %s6, %s4
  // Predicated region
  $region2: #{resnet_forward.14} parent=0 // pred_check
    _
  $region3: #{resnet_forward.14} parent=0 // pred_check_branch
    %9 = sbr.rel (0) target = $region5
  $region4: #{resnet_forward.14} parent=0 // pred_region
    _
  $region5: #{resnet_forward.14} parent=0 // pred_fallthru
    _
  // Predicated region
  $region6: #{resnet_forward.14} parent=0 // pred_check
    _
  $region7: #{resnet_forward.14} parent=0 // pred_check_branch
    %11 = sbr.rel (0) target = $region9
  $region8: #{resnet_forward.14} parent=0 // pred_region
    _
  $region9: #{resnet_forward.14} parent=0 // pred_fallthru
    _
  // Predicated region
  $region10: #{resnet_forward.14} parent=0 // pred_check
    _
  $region11: #{resnet_forward.14} parent=0 // pred_check_branch
    %13 = sbr.rel (0) target = $region13
  $region12: #{resnet_forward.14} parent=0 // pred_region
    _
  $region13: #{resnet_forward.14} parent=0 // pred_fallthru
    _
  %p15 = scmp.eq.s32.totalorder 0, 0
  // Predicated region
  $region14: #{resnet_forward.14} parent=0 // pred_check
    %p16 = pneg %p15
  $region15: #{resnet_forward.14} parent=0 // pred_check_branch
    %18 = sbr.rel (%p16) target = $region17
  $region16: #{resnet_forward.14} parent=0 // pred_region
    %19 = vst [vmem:[#allocation2] sm:$0xff] 0.0
    %20 = vst [vmem:[#allocation2 + $0x8] sm:$0xff] 0.0
  $region17: #{resnet_forward.14} parent=0 // pred_fallthru
    _
  %v21 = vld [vmem:[#allocation2] sm:$0xff]
  %v22 = vld [vmem:[#allocation2 + $0x8] sm:$0xff]
  %v23 = vld [vmem:[%s0] sm:$0xf]
  %v24 = vld [vmem:[%s0 + $0x4] sm:$0xf]
  %v25 = vld [vmem:[%s1] sm:$0xf]
  %v26 = vld [vmem:[%s1 + $0x4] sm:$0xf]
  %v27 = vld [vmem:[%s1 + $0x8] sm:$0xf]
  %v28 = vld [vmem:[%s1 + $0xc] sm:$0xf]
  %v29 = vld [vmem:[%s1 + $0x10] sm:$0xf]
  %v30 = vld [vmem:[%s1 + $0x14] sm:$0xf]
  %v31 = vld [vmem:[%s1 + $0x18] sm:$0xf]
  %v32 = vld [vmem:[%s1 + $0x1c] sm:$0xf]
  %v33 = vld [vmem:[%s1 + $0x20] sm:$0xf]
  %v34 = vld [vmem:[%s1 + $0x24] sm:$0xf]
  %v35 = vld [vmem:[%s1 + $0x28] sm:$0xf]
  %v36 = vld [vmem:[%s1 + $0x2c] sm:$0xf]
  %v37 = vld [vmem:[%s1 + $0x30] sm:$0xf]
  %v38 = vld [vmem:[%s1 + $0x34] sm:$0xf]
  %v39 = vld [vmem:[%s1 + $0x38] sm:$0xf]
  %v40 = vld [vmem:[%s1 + $0x3c] sm:$0xf]
  %v43 = vunpack.c.l.b16 %v23
  %v44 = vunpack.c.l.b16 %v24
  %v45 = vpack.c.b16 %v44, %v43
  %v63 = vunpack.c.l.b16 %v25
  %v64 = vunpack.c.l.b16 %v26
  %v65 = vunpack.c.l.b16 %v27
  %v66 = vunpack.c.l.b16 %v28
  %v67 = vunpack.c.l.b16 %v29
  %v68 = vunpack.c.l.b16 %v30
  %v69 = vunpack.c.l.b16 %v31
  %v70 = vunpack.c.l.b16 %v32
  %v71 = vunpack.c.l.b16 %v33
  %v72 = vunpack.c.l.b16 %v34
  %v73 = vunpack.c.l.b16 %v35
  %v74 = vunpack.c.l.b16 %v36
  %v75 = vunpack.c.l.b16 %v37
  %v76 = vunpack.c.l.b16 %v38
  %v77 = vunpack.c.l.b16 %v39
  %v78 = vunpack.c.l.b16 %v40
  %v79 = vpack.c.b16 %v64, %v63
  %v80 = vpack.c.b16 %v66, %v65
  %v81 = vpack.c.b16 %v68, %v67
  %v82 = vpack.c.b16 %v70, %v69
  %v83 = vpack.c.b16 %v72, %v71
  %v84 = vpack.c.b16 %v74, %v73
  %v85 = vpack.c.b16 %v76, %v75
  %v86 = vpack.c.b16 %v78, %v77
  %95 = vmatprep.subr.bf16.mxu0 0
  %96 = vmatpush1.bf16.msra.mxu0 %v79
  %97 = vmatprep.subr.bf16.mxu0 0
  %98 = vmatpush1.bf16.msra.mxu0 %v80
  %99 = vmatprep.subr.bf16.mxu0 0
  %100 = vmatpush1.bf16.msra.mxu0 %v81
  %101 = vmatprep.subr.bf16.mxu0 0
  %102 = vmatpush1.bf16.msra.mxu0 %v82
  %103 = vmatprep.subr.bf16.mxu0 0
  %104 = vmatpush1.bf16.msra.mxu0 %v83
  %105 = vmatprep.subr.bf16.mxu0 0
  %106 = vmatpush1.bf16.msra.mxu0 %v84
  %107 = vmatprep.subr.bf16.mxu0 0
  %108 = vmatpush1.bf16.msra.mxu0 %v85
  %109 = vmatprep.subr.bf16.mxu0 0
  %110 = vmatpush1.bf16.msra.mxu0 %v86
  %111 = vmatprep.subr.bf16.mxu0 0
  %112 = vmatpush1.bf16.msra.mxu0 0
  %113 = vmatprep.subr.bf16.mxu0 0
  %114 = vmatpush1.bf16.msra.mxu0 0
  %115 = vmatprep.subr.bf16.mxu0 0
  %116 = vmatpush1.bf16.msra.mxu0 0
  %117 = vmatprep.subr.bf16.mxu0 0
  %118 = vmatpush1.bf16.msra.mxu0 0
  %119 = vmatprep.subr.bf16.mxu0 0
  %120 = vmatpush1.bf16.msra.mxu0 0
  %121 = vmatprep.subr.bf16.mxu0 0
  %122 = vmatpush1.bf16.msra.mxu0 0
  %123 = vmatprep.subr.bf16.mxu0 0
  %124 = vmatpush1.bf16.msra.mxu0 0
  %125 = vmatprep.subr.bf16.mxu0 0
  %126 = vmatpush1.bf16.msra.mxu0 0
  %127 = vmatprep.mubr.bf16.mxu0 0
  %128 = vmatmul.mubr.bf16.gmra.mrb[0].mxu0 %v45
  %v129 = vpop.f32.mrb[0].mxu0
  %v130 = vadd.f32 0.0, %v129
  %v131 = vpop.f32.mrb[0].mxu0
  %v132 = vpop.f32.mrb[0].mxu0
  %v133 = vadd.f32 0.0, %v132
  %v134 = vpop.f32.mrb[0].mxu0
  %135 = vdwg.mxu0
  %v136 = vadd.f32 %v21, %v130
  %v137 = vadd.f32 %v22, %v133
  %138 = vst [vmem:[#allocation2] sm:$0xff] %v136
  %139 = vst [vmem:[#allocation2 + $0x8] sm:$0xff] %v137
  // Predicated region
  $region18: #{resnet_forward.14} parent=0 // pred_check
    %p140 = pneg %p15
  $region19: #{resnet_forward.14} parent=0 // pred_check_branch
    %142 = sbr.rel (%p140) target = $region21
  $region20: #{resnet_forward.14} parent=0 // pred_region
    %v143 = vld [vmem:[#allocation2] sm:$0xff]
    %v144 = vld [vmem:[#allocation2 + $0x8] sm:$0xff]
    %v145 = vld [vmem:[%s2] sm:$0x1]
    %v147 = vlaneseq
    %v148 = vshrl.u32 %v147, 7
    %v149 = vsub.s32 0, %v148
    %v150 = vrot.slane %v145, %v149
    %v152 = vadd.f32 %v143, %v150
    %v153 = vadd.f32 %v144, %v150
    %v154 = vmax.f32 %v152, 0.0
    %v155 = vmax.f32 %v153, 0.0
    %v156 = vpack.c.bf16 %v155, %v154
    %v158 = vunpack.c.l.b16 %v156
    %v159 = vunpack.c.h.b16 %v156
    %v160 = vpack.c.b16 %v158, %v158
    %v161 = vpack.c.b16 %v159, %v159
    %164 = vst [vmem:[%s3] sm:$0xf] %v160
    %165 = vst [vmem:[%s3 + $0x4] sm:$0xf] %v161
  $region21: #{resnet_forward.14} parent=0 // pred_fallthru
    _
  // Predicated region
  $region22: #{resnet_forward.14} parent=0 // pred_check
    _
  $region23: #{resnet_forward.14} parent=0 // pred_check_branch
    %167 = sbr.rel (0) target = $region25
  $region24: #{resnet_forward.14} parent=0 // pred_region
    _
  $region25: #{resnet_forward.14} parent=0 // pred_fallthru
    _
  // Predicated region
  $region26: #{resnet_forward.14} parent=0 // pred_check
    _
  $region27: #{resnet_forward.14} parent=0 // pred_check_branch
    %169 = sbr.rel (0) target = $region29
  $region28: #{resnet_forward.14} parent=0 // pred_region
    _
  $region29: #{resnet_forward.14} parent=0 // pred_fallthru
    _

// kernel: resnet_forward.15
$region0: #{resnet_forward.15}
  #allocation0 [shape = 'u32[]', space=smem, size = 0x4, offset = 0x4, fixed_abs, tag = 'smem constant byte address 0x4 - core index']
  #allocation1 [shape = 'u32[144,128]{1,0:T(1,128)}', space=vmem, size = 0x12000, scoped, tag = 'internal scratch']
  #allocation2 [shape = 'f32[16,128]{1,0:T(8,128)}', space=vmem, size = 0x2000, scoped, tag = 'scratch operand']
  %s0 = inlined_call_operand.vmem [shape: bf16[16,128], index: 0, kind: input, shape index: {}]
  %s1 = inlined_call_operand.vmem [shape: bf16[128,128], index: 1, kind: input, shape index: {}]
  %s2 = inlined_call_operand.vmem [shape: f32[1,128], index: 2, kind: input, shape index: {}]
  %s3 = inlined_call_operand.vmem [shape: bf16[16,128], index: 3, kind: output, shape index: {}]
  %s4 = sld [smem:[#allocation0]]
  $region30: #{resnet_forward.15} parent=0
    _
  %s6 = ssub.s32 1, %s4
  %s7 = scalar_select 0, %s6, %s4
  // Predicated region
  $region2: #{resnet_forward.15} parent=0 // pred_check
    _
  $region3: #{resnet_forward.15} parent=0 // pred_check_branch
    %9 = sbr.rel (0) target = $region5
  $region4: #{resnet_forward.15} parent=0 // pred_region
    _
  $region5: #{resnet_forward.15} parent=0 // pred_fallthru
    _
  // Predicated region
  $region6: #{resnet_forward.15} parent=0 // pred_check
    _
  $region7: #{resnet_forward.15} parent=0 // pred_check_branch
    %11 = sbr.rel (0) target = $region9
  $region8: #{resnet_forward.15} parent=0 // pred_region
    _
  $region9: #{resnet_forward.15} parent=0 // pred_fallthru
    _
  // Predicated region
  $region10: #{resnet_forward.15} parent=0 // pred_check
    _
  $region11: #{resnet_forward.15} parent=0 // pred_check_branch
    %13 = sbr.rel (0) target = $region13
  $region12: #{resnet_forward.15} parent=0 // pred_region
    _
  $region13: #{resnet_forward.15} parent=0 // pred_fallthru
    _
  %p15 = scmp.eq.s32.totalorder 0, 0
  // Predicated region
  $region14: #{resnet_forward.15} parent=0 // pred_check
    %p16 = pneg %p15
  $region15: #{resnet_forward.15} parent=0 // pred_check_branch
    %18 = sbr.rel (%p16) target = $region17
  $region16: #{resnet_forward.15} parent=0 // pred_region
    %19 = vst [vmem:[#allocation2] sm:$0xff] 0.0
    %20 = vst [vmem:[#allocation2 + $0x8] sm:$0xff] 0.0
  $region17: #{resnet_forward.15} parent=0 // pred_fallthru
    _
  %v21 = vld [vmem:[#allocation2] sm:$0xff]
  %v22 = vld [vmem:[#allocation2 + $0x8] sm:$0xff]
  %v23 = vld [vmem:[%s0] sm:$0xf]
  %v24 = vld [vmem:[%s0 + $0x4] sm:$0xf]
  %v25 = vld [vmem:[%s1] sm:$0xf]
  %v26 = vld [vmem:[%s1 + $0x4] sm:$0xf]
  %v27 = vld [vmem:[%s1 + $0x8] sm:$0xf]
  %v28 = vld [vmem:[%s1 + $0xc] sm:$0xf]
  %v29 = vld [vmem:[%s1 + $0x10] sm:$0xf]
  %v30 = vld [vmem:[%s1 + $0x14] sm:$0xf]
  %v31 = vld [vmem:[%s1 + $0x18] sm:$0xf]
  %v32 = vld [vmem:[%s1 + $0x1c] sm:$0xf]
  %v33 = vld [vmem:[%s1 + $0x20] sm:$0xf]
  %v34 = vld [vmem:[%s1 + $0x24] sm:$0xf]
  %v35 = vld [vmem:[%s1 + $0x28] sm:$0xf]
  %v36 = vld [vmem:[%s1 + $0x2c] sm:$0xf]
  %v37 = vld [vmem:[%s1 + $0x30] sm:$0xf]
  %v38 = vld [vmem:[%s1 + $0x34] sm:$0xf]
  %v39 = vld [vmem:[%s1 + $0x38] sm:$0xf]
  %v40 = vld [vmem:[%s1 + $0x3c] sm:$0xf]
  %v43 = vunpack.c.l.b16 %v23
  %v44 = vunpack.c.l.b16 %v24
  %v45 = vpack.c.b16 %v44, %v43
  %v63 = vunpack.c.l.b16 %v25
  %v64 = vunpack.c.l.b16 %v26
  %v65 = vunpack.c.l.b16 %v27
  %v66 = vunpack.c.l.b16 %v28
  %v67 = vunpack.c.l.b16 %v29
  %v68 = vunpack.c.l.b16 %v30
  %v69 = vunpack.c.l.b16 %v31
  %v70 = vunpack.c.l.b16 %v32
  %v71 = vunpack.c.l.b16 %v33
  %v72 = vunpack.c.l.b16 %v34
  %v73 = vunpack.c.l.b16 %v35
  %v74 = vunpack.c.l.b16 %v36
  %v75 = vunpack.c.l.b16 %v37
  %v76 = vunpack.c.l.b16 %v38
  %v77 = vunpack.c.l.b16 %v39
  %v78 = vunpack.c.l.b16 %v40
  %v79 = vpack.c.b16 %v64, %v63
  %v80 = vpack.c.b16 %v66, %v65
  %v81 = vpack.c.b16 %v68, %v67
  %v82 = vpack.c.b16 %v70, %v69
  %v83 = vpack.c.b16 %v72, %v71
  %v84 = vpack.c.b16 %v74, %v73
  %v85 = vpack.c.b16 %v76, %v75
  %v86 = vpack.c.b16 %v78, %v77
  %95 = vmatprep.subr.bf16.mxu0 0
  %96 = vmatpush1.bf16.msra.mxu0 %v79
  %97 = vmatprep.subr.bf16.mxu0 0
  %98 = vmatpush1.bf16.msra.mxu0 %v80
  %99 = vmatprep.subr.bf16.mxu0 0
  %100 = vmatpush1.bf16.msra.mxu0 %v81
  %101 = vmatprep.subr.bf16.mxu0 0
  %102 = vmatpush1.bf16.msra.mxu0 %v82
  %103 = vmatprep.subr.bf16.mxu0 0
  %104 = vmatpush1.bf16.msra.mxu0 %v83
  %105 = vmatprep.subr.bf16.mxu0 0
  %106 = vmatpush1.bf16.msra.mxu0 %v84
  %107 = vmatprep.subr.bf16.mxu0 0
  %108 = vmatpush1.bf16.msra.mxu0 %v85
  %109 = vmatprep.subr.bf16.mxu0 0
  %110 = vmatpush1.bf16.msra.mxu0 %v86
  %111 = vmatprep.subr.bf16.mxu0 0
  %112 = vmatpush1.bf16.msra.mxu0 0
  %113 = vmatprep.subr.bf16.mxu0 0
  %114 = vmatpush1.bf16.msra.mxu0 0
  %115 = vmatprep.subr.bf16.mxu0 0
  %116 = vmatpush1.bf16.msra.mxu0 0
  %117 = vmatprep.subr.bf16.mxu0 0
  %118 = vmatpush1.bf16.msra.mxu0 0
  %119 = vmatprep.subr.bf16.mxu0 0
  %120 = vmatpush1.bf16.msra.mxu0 0
  %121 = vmatprep.subr.bf16.mxu0 0
  %122 = vmatpush1.bf16.msra.mxu0 0
  %123 = vmatprep.subr.bf16.mxu0 0
  %124 = vmatpush1.bf16.msra.mxu0 0
  %125 = vmatprep.subr.bf16.mxu0 0
  %126 = vmatpush1.bf16.msra.mxu0 0
  %127 = vmatprep.mubr.bf16.mxu0 0
  %128 = vmatmul.mubr.bf16.gmra.mrb[0].mxu0 %v45
  %v129 = vpop.f32.mrb[0].mxu0
  %v130 = vadd.f32 0.0, %v129
  %v131 = vpop.f32.mrb[0].mxu0
  %v132 = vpop.f32.mrb[0].mxu0
  %v133 = vadd.f32 0.0, %v132
  %v134 = vpop.f32.mrb[0].mxu0
  %135 = vdwg.mxu0
  %v136 = vadd.f32 %v21, %v130
  %v137 = vadd.f32 %v22, %v133
  %138 = vst [vmem:[#allocation2] sm:$0xff] %v136
  %139 = vst [vmem:[#allocation2 + $0x8] sm:$0xff] %v137
  // Predicated region
  $region18: #{resnet_forward.15} parent=0 // pred_check
    %p140 = pneg %p15
  $region19: #{resnet_forward.15} parent=0 // pred_check_branch
    %142 = sbr.rel (%p140) target = $region21
  $region20: #{resnet_forward.15} parent=0 // pred_region
    %v143 = vld [vmem:[#allocation2] sm:$0xff]
    %v144 = vld [vmem:[#allocation2 + $0x8] sm:$0xff]
    %v145 = vld [vmem:[%s2] sm:$0x1]
    %v147 = vlaneseq
    %v148 = vshrl.u32 %v147, 7
    %v149 = vsub.s32 0, %v148
    %v150 = vrot.slane %v145, %v149
    %v152 = vadd.f32 %v143, %v150
    %v153 = vadd.f32 %v144, %v150
    %v154 = vpack.c.bf16 %v153, %v152
    %v156 = vunpack.c.l.b16 %v154
    %v157 = vunpack.c.h.b16 %v154
    %v158 = vpack.c.b16 %v156, %v156
    %v159 = vpack.c.b16 %v157, %v157
    %162 = vst [vmem:[%s3] sm:$0xf] %v158
    %163 = vst [vmem:[%s3 + $0x4] sm:$0xf] %v159
  $region21: #{resnet_forward.15} parent=0 // pred_fallthru
    _
  // Predicated region
  $region22: #{resnet_forward.15} parent=0 // pred_check
    _
  $region23: #{resnet_forward.15} parent=0 // pred_check_branch
    %165 = sbr.rel (0) target = $region25
  $region24: #{resnet_forward.15} parent=0 // pred_region
    _
  $region25: #{resnet_forward.15} parent=0 // pred_fallthru
    _
  // Predicated region
  $region26: #{resnet_forward.15} parent=0 // pred_check
    _
  $region27: #{resnet_forward.15} parent=0 // pred_check_branch
    %167 = sbr.rel (0) target = $region29
  $region28: #{resnet_forward.15} parent=0 // pred_region
    _
  $region29: #{resnet_forward.15} parent=0 // pred_fallthru
    _

// kernel: resnet_forward.16
$region0: #{resnet_forward.16}
  #allocation0 [shape = 'u32[]', space=smem, size = 0x4, offset = 0x4, fixed_abs, tag = 'smem constant byte address 0x4 - core index']
  #allocation1 [shape = 'u32[144,128]{1,0:T(1,128)}', space=vmem, size = 0x12000, scoped, tag = 'internal scratch']
  #allocation2 [shape = 'f32[16,128]{1,0:T(8,128)}', space=vmem, size = 0x2000, scoped, tag = 'scratch operand']
  %s0 = inlined_call_operand.vmem [shape: bf16[16,128], index: 0, kind: input, shape index: {}]
  %s1 = inlined_call_operand.vmem [shape: bf16[128,128], index: 1, kind: input, shape index: {}]
  %s2 = inlined_call_operand.vmem [shape: f32[1,128], index: 2, kind: input, shape index: {}]
  %s3 = inlined_call_operand.vmem [shape: bf16[16,128], index: 3, kind: input, shape index: {}]
  %s4 = inlined_call_operand.vmem [shape: bf16[16,128], index: 4, kind: output, shape index: {}]
  %s5 = sld [smem:[#allocation0]]
  $region34: #{resnet_forward.16} parent=0
    _
  %s7 = ssub.s32 1, %s5
  %s8 = scalar_select 0, %s7, %s5
  // Predicated region
  $region2: #{resnet_forward.16} parent=0 // pred_check
    _
  $region3: #{resnet_forward.16} parent=0 // pred_check_branch
    %10 = sbr.rel (0) target = $region5
  $region4: #{resnet_forward.16} parent=0 // pred_region
    _
  $region5: #{resnet_forward.16} parent=0 // pred_fallthru
    _
  // Predicated region
  $region6: #{resnet_forward.16} parent=0 // pred_check
    _
  $region7: #{resnet_forward.16} parent=0 // pred_check_branch
    %12 = sbr.rel (0) target = $region9
  $region8: #{resnet_forward.16} parent=0 // pred_region
    _
  $region9: #{resnet_forward.16} parent=0 // pred_fallthru
    _
  // Predicated region
  $region10: #{resnet_forward.16} parent=0 // pred_check
    _
  $region11: #{resnet_forward.16} parent=0 // pred_check_branch
    %14 = sbr.rel (0) target = $region13
  $region12: #{resnet_forward.16} parent=0 // pred_region
    _
  $region13: #{resnet_forward.16} parent=0 // pred_fallthru
    _
  // Predicated region
  $region14: #{resnet_forward.16} parent=0 // pred_check
    _
  $region15: #{resnet_forward.16} parent=0 // pred_check_branch
    %16 = sbr.rel (0) target = $region17
  $region16: #{resnet_forward.16} parent=0 // pred_region
    _
  $region17: #{resnet_forward.16} parent=0 // pred_fallthru
    _
  %p18 = scmp.eq.s32.totalorder 0, 0
  // Predicated region
  $region18: #{resnet_forward.16} parent=0 // pred_check
    %p19 = pneg %p18
  $region19: #{resnet_forward.16} parent=0 // pred_check_branch
    %21 = sbr.rel (%p19) target = $region21
  $region20: #{resnet_forward.16} parent=0 // pred_region
    %22 = vst [vmem:[#allocation2] sm:$0xff] 0.0
    %23 = vst [vmem:[#allocation2 + $0x8] sm:$0xff] 0.0
  $region21: #{resnet_forward.16} parent=0 // pred_fallthru
    _
  %v24 = vld [vmem:[#allocation2] sm:$0xff]
  %v25 = vld [vmem:[#allocation2 + $0x8] sm:$0xff]
  %v26 = vld [vmem:[%s0] sm:$0xf]
  %v27 = vld [vmem:[%s0 + $0x4] sm:$0xf]
  %v28 = vld [vmem:[%s1] sm:$0xf]
  %v29 = vld [vmem:[%s1 + $0x4] sm:$0xf]
  %v30 = vld [vmem:[%s1 + $0x8] sm:$0xf]
  %v31 = vld [vmem:[%s1 + $0xc] sm:$0xf]
  %v32 = vld [vmem:[%s1 + $0x10] sm:$0xf]
  %v33 = vld [vmem:[%s1 + $0x14] sm:$0xf]
  %v34 = vld [vmem:[%s1 + $0x18] sm:$0xf]
  %v35 = vld [vmem:[%s1 + $0x1c] sm:$0xf]
  %v36 = vld [vmem:[%s1 + $0x20] sm:$0xf]
  %v37 = vld [vmem:[%s1 + $0x24] sm:$0xf]
  %v38 = vld [vmem:[%s1 + $0x28] sm:$0xf]
  %v39 = vld [vmem:[%s1 + $0x2c] sm:$0xf]
  %v40 = vld [vmem:[%s1 + $0x30] sm:$0xf]
  %v41 = vld [vmem:[%s1 + $0x34] sm:$0xf]
  %v42 = vld [vmem:[%s1 + $0x38] sm:$0xf]
  %v43 = vld [vmem:[%s1 + $0x3c] sm:$0xf]
  %v46 = vunpack.c.l.b16 %v26
  %v47 = vunpack.c.l.b16 %v27
  %v48 = vpack.c.b16 %v47, %v46
  %v66 = vunpack.c.l.b16 %v28
  %v67 = vunpack.c.l.b16 %v29
  %v68 = vunpack.c.l.b16 %v30
  %v69 = vunpack.c.l.b16 %v31
  %v70 = vunpack.c.l.b16 %v32
  %v71 = vunpack.c.l.b16 %v33
  %v72 = vunpack.c.l.b16 %v34
  %v73 = vunpack.c.l.b16 %v35
  %v74 = vunpack.c.l.b16 %v36
  %v75 = vunpack.c.l.b16 %v37
  %v76 = vunpack.c.l.b16 %v38
  %v77 = vunpack.c.l.b16 %v39
  %v78 = vunpack.c.l.b16 %v40
  %v79 = vunpack.c.l.b16 %v41
  %v80 = vunpack.c.l.b16 %v42
  %v81 = vunpack.c.l.b16 %v43
  %v82 = vpack.c.b16 %v67, %v66
  %v83 = vpack.c.b16 %v69, %v68
  %v84 = vpack.c.b16 %v71, %v70
  %v85 = vpack.c.b16 %v73, %v72
  %v86 = vpack.c.b16 %v75, %v74
  %v87 = vpack.c.b16 %v77, %v76
  %v88 = vpack.c.b16 %v79, %v78
  %v89 = vpack.c.b16 %v81, %v80
  %98 = vmatprep.subr.bf16.mxu0 0
  %99 = vmatpush1.bf16.msra.mxu0 %v82
  %100 = vmatprep.subr.bf16.mxu0 0
  %101 = vmatpush1.bf16.msra.mxu0 %v83
  %102 = vmatprep.subr.bf16.mxu0 0
  %103 = vmatpush1.bf16.msra.mxu0 %v84
  %104 = vmatprep.subr.bf16.mxu0 0
  %105 = vmatpush1.bf16.msra.mxu0 %v85
  %106 = vmatprep.subr.bf16.mxu0 0
  %107 = vmatpush1.bf16.msra.mxu0 %v86
  %108 = vmatprep.subr.bf16.mxu0 0
  %109 = vmatpush1.bf16.msra.mxu0 %v87
  %110 = vmatprep.subr.bf16.mxu0 0
  %111 = vmatpush1.bf16.msra.mxu0 %v88
  %112 = vmatprep.subr.bf16.mxu0 0
  %113 = vmatpush1.bf16.msra.mxu0 %v89
  %114 = vmatprep.subr.bf16.mxu0 0
  %115 = vmatpush1.bf16.msra.mxu0 0
  %116 = vmatprep.subr.bf16.mxu0 0
  %117 = vmatpush1.bf16.msra.mxu0 0
  %118 = vmatprep.subr.bf16.mxu0 0
  %119 = vmatpush1.bf16.msra.mxu0 0
  %120 = vmatprep.subr.bf16.mxu0 0
  %121 = vmatpush1.bf16.msra.mxu0 0
  %122 = vmatprep.subr.bf16.mxu0 0
  %123 = vmatpush1.bf16.msra.mxu0 0
  %124 = vmatprep.subr.bf16.mxu0 0
  %125 = vmatpush1.bf16.msra.mxu0 0
  %126 = vmatprep.subr.bf16.mxu0 0
  %127 = vmatpush1.bf16.msra.mxu0 0
  %128 = vmatprep.subr.bf16.mxu0 0
  %129 = vmatpush1.bf16.msra.mxu0 0
  %130 = vmatprep.mubr.bf16.mxu0 0
  %131 = vmatmul.mubr.bf16.gmra.mrb[0].mxu0 %v48
  %v132 = vpop.f32.mrb[0].mxu0
  %v133 = vadd.f32 0.0, %v132
  %v134 = vpop.f32.mrb[0].mxu0
  %v135 = vpop.f32.mrb[0].mxu0
  %v136 = vadd.f32 0.0, %v135
  %v137 = vpop.f32.mrb[0].mxu0
  %138 = vdwg.mxu0
  %v139 = vadd.f32 %v24, %v133
  %v140 = vadd.f32 %v25, %v136
  %141 = vst [vmem:[#allocation2] sm:$0xff] %v139
  %142 = vst [vmem:[#allocation2 + $0x8] sm:$0xff] %v140
  // Predicated region
  $region22: #{resnet_forward.16} parent=0 // pred_check
    %p143 = pneg %p18
  $region23: #{resnet_forward.16} parent=0 // pred_check_branch
    %145 = sbr.rel (%p143) target = $region25
  $region24: #{resnet_forward.16} parent=0 // pred_region
    %v146 = vld [vmem:[#allocation2] sm:$0xff]
    %v147 = vld [vmem:[#allocation2 + $0x8] sm:$0xff]
    %v148 = vld [vmem:[%s2] sm:$0x1]
    %v150 = vlaneseq
    %v151 = vshrl.u32 %v150, 7
    %v152 = vsub.s32 0, %v151
    %v153 = vrot.slane %v148, %v152
    %v155 = vadd.f32 %v146, %v153
    %v156 = vadd.f32 %v147, %v153
    %v157 = vld [vmem:[%s3] sm:$0xf]
    %v158 = vld [vmem:[%s3 + $0x4] sm:$0xf]
    %v159 = vunpack.c.l.bf16 %v157
    %v160 = vunpack.c.l.bf16 %v158
    %v161 = vadd.f32 %v155, %v159
    %v162 = vadd.f32 %v156, %v160
    %v163 = vmax.f32 %v161, 0.0
    %v164 = vmax.f32 %v162, 0.0
    %v165 = vpack.c.bf16 %v164, %v163
    %v167 = vunpack.c.l.b16 %v165
    %v168 = vunpack.c.h.b16 %v165
    %v169 = vpack.c.b16 %v167, %v167
    %v170 = vpack.c.b16 %v168, %v168
    %173 = vst [vmem:[%s4] sm:$0xf] %v169
    %174 = vst [vmem:[%s4 + $0x4] sm:$0xf] %v170
  $region25: #{resnet_forward.16} parent=0 // pred_fallthru
    _
  // Predicated region
  $region26: #{resnet_forward.16} parent=0 // pred_check
    _
  $region27: #{resnet_forward.16} parent=0 // pred_check_branch
    %176 = sbr.rel (0) target = $region29
  $region28: #{resnet_forward.16} parent=0 // pred_region
    _
  $region29: #{resnet_forward.16} parent=0 // pred_fallthru
    _
  // Predicated region
  $region30: #{resnet_forward.16} parent=0 // pred_check
    _
  $region31: #{resnet_forward.16} parent=0 // pred_check_branch
    %178 = sbr.rel (0) target = $region33
  $region32: #{resnet_forward.16} parent=0 // pred_region
    _
  $region33: #{resnet_forward.16} parent=0 // pred_fallthru
    _

// kernel: resnet_forward.17
$region0: #{resnet_forward.17}
  #allocation0 [shape = 'u32[]', space=smem, size = 0x4, offset = 0x4, fixed_abs, tag = 'smem constant byte address 0x4 - core index']
  #allocation1 [shape = 'u32[144,128]{1,0:T(1,128)}', space=vmem, size = 0x12000, scoped, tag = 'internal scratch']
  %s0 = inlined_call_operand.vmem [shape: bf16[8,4,32], index: 0, kind: input, shape index: {}]
  %s1 = inlined_call_operand.vmem [shape: bf16[32,128], index: 1, kind: input, shape index: {}]
  %s2 = inlined_call_operand.vmem [shape: f32[1,128], index: 2, kind: input, shape index: {}]
  %s3 = inlined_call_operand.vmem [shape: f32[8,128], index: 3, kind: output, shape index: {}]
  %s4 = sld [smem:[#allocation0]]
  $region22: #{resnet_forward.17} parent=0
    _
  %s6 = ssub.s32 1, %s4
  %s7 = scalar_select 0, %s6, %s4
  // Predicated region
  $region2: #{resnet_forward.17} parent=0 // pred_check
    _
  $region3: #{resnet_forward.17} parent=0 // pred_check_branch
    %9 = sbr.rel (0) target = $region5
  $region4: #{resnet_forward.17} parent=0 // pred_region
    _
  $region5: #{resnet_forward.17} parent=0 // pred_fallthru
    _
  // Predicated region
  $region6: #{resnet_forward.17} parent=0 // pred_check
    _
  $region7: #{resnet_forward.17} parent=0 // pred_check_branch
    %11 = sbr.rel (0) target = $region9
  $region8: #{resnet_forward.17} parent=0 // pred_region
    _
  $region9: #{resnet_forward.17} parent=0 // pred_fallthru
    _
  // Predicated region
  $region10: #{resnet_forward.17} parent=0 // pred_check
    _
  $region11: #{resnet_forward.17} parent=0 // pred_check_branch
    %13 = sbr.rel (0) target = $region13
  $region12: #{resnet_forward.17} parent=0 // pred_region
    _
  $region13: #{resnet_forward.17} parent=0 // pred_fallthru
    _
  %v15 = vld [vmem:[%s0] sm:$0x3]
  %v16 = vld [vmem:[%s0 + $0x2] sm:$0x3]
  %v17 = vld [vmem:[%s0 + $0x4] sm:$0x3]
  %v18 = vld [vmem:[%s0 + $0x6] sm:$0x3]
  %v19 = vld [vmem:[%s0 + $0x8] sm:$0x3]
  %v20 = vld [vmem:[%s0 + $0xa] sm:$0x3]
  %v21 = vld [vmem:[%s0 + $0xc] sm:$0x3]
  %v22 = vld [vmem:[%s0 + $0xe] sm:$0x3]
  %v23 = vunpack.c.l.bf16 %v15
  %v24 = vunpack.c.l.bf16 %v16
  %v25 = vunpack.c.l.bf16 %v17
  %v26 = vunpack.c.l.bf16 %v18
  %v27 = vunpack.c.l.bf16 %v19
  %v28 = vunpack.c.l.bf16 %v20
  %v29 = vunpack.c.l.bf16 %v21
  %v30 = vunpack.c.l.bf16 %v22
  %vm31 = vcmask 257024
  %v32 = vsel %vm31, %v23, 0.0
  %v33 = vrot.slane %v32, 4
  %v34 = vadd.f32 %v32, %v33
  %v35 = vrot.slane %v34, 2
  %v36 = vadd.f32 %v34, %v35
  %v37 = vrot.slane %v36, 1
  %v38 = vadd.f32 %v36, %v37
  %v39 = vsel %vm31, %v24, 0.0
  %v40 = vrot.slane %v39, 4
  %v41 = vadd.f32 %v39, %v40
  %v42 = vrot.slane %v41, 2
  %v43 = vadd.f32 %v41, %v42
  %v44 = vrot.slane %v43, 1
  %v45 = vadd.f32 %v43, %v44
  %v46 = vsel %vm31, %v25, 0.0
  %v47 = vrot.slane %v46, 4
  %v48 = vadd.f32 %v46, %v47
  %v49 = vrot.slane %v48, 2
  %v50 = vadd.f32 %v48, %v49
  %v51 = vrot.slane %v50, 1
  %v52 = vadd.f32 %v50, %v51
  %v53 = vsel %vm31, %v26, 0.0
  %v54 = vrot.slane %v53, 4
  %v55 = vadd.f32 %v53, %v54
  %v56 = vrot.slane %v55, 2
  %v57 = vadd.f32 %v55, %v56
  %v58 = vrot.slane %v57, 1
  %v59 = vadd.f32 %v57, %v58
  %v60 = vsel %vm31, %v27, 0.0
  %v61 = vrot.slane %v60, 4
  %v62 = vadd.f32 %v60, %v61
  %v63 = vrot.slane %v62, 2
  %v64 = vadd.f32 %v62, %v63
  %v65 = vrot.slane %v64, 1
  %v66 = vadd.f32 %v64, %v65
  %v67 = vsel %vm31, %v28, 0.0
  %v68 = vrot.slane %v67, 4
  %v69 = vadd.f32 %v67, %v68
  %v70 = vrot.slane %v69, 2
  %v71 = vadd.f32 %v69, %v70
  %v72 = vrot.slane %v71, 1
  %v73 = vadd.f32 %v71, %v72
  %v74 = vsel %vm31, %v29, 0.0
  %v75 = vrot.slane %v74, 4
  %v76 = vadd.f32 %v74, %v75
  %v77 = vrot.slane %v76, 2
  %v78 = vadd.f32 %v76, %v77
  %v79 = vrot.slane %v78, 1
  %v80 = vadd.f32 %v78, %v79
  %v81 = vsel %vm31, %v30, 0.0
  %v82 = vrot.slane %v81, 4
  %v83 = vadd.f32 %v81, %v82
  %v84 = vrot.slane %v83, 2
  %v85 = vadd.f32 %v83, %v84
  %v86 = vrot.slane %v85, 1
  %v87 = vadd.f32 %v85, %v86
  %v88 = vrcp.pop 4.0
  %v89 = vmul.f32 %v38, %v88
  %v90 = vmul.f32 %v45, %v88
  %v91 = vmul.f32 %v52, %v88
  %v92 = vmul.f32 %v59, %v88
  %v93 = vmul.f32 %v66, %v88
  %v94 = vmul.f32 %v73, %v88
  %v95 = vmul.f32 %v80, %v88
  %v96 = vmul.f32 %v87, %v88
  %v97 = vpack.c.bf16 %v89, %v89
  %v98 = vpack.c.bf16 %v90, %v90
  %v99 = vpack.c.bf16 %v91, %v91
  %v100 = vpack.c.bf16 %v92, %v92
  %v101 = vpack.c.bf16 %v93, %v93
  %v102 = vpack.c.bf16 %v94, %v94
  %v103 = vpack.c.bf16 %v95, %v95
  %v104 = vpack.c.bf16 %v96, %v96
  %v105 = vld [vmem:[%s1] sm:$0xf]
  %v106 = vld [vmem:[%s1 + $0x4] sm:$0xf]
  %v107 = vld [vmem:[%s1 + $0x8] sm:$0xf]
  %v108 = vld [vmem:[%s1 + $0xc] sm:$0xf]
  %v109 = vld [vmem:[%s2] sm:$0x1]
  %v111 = vlaneseq
  %v112 = vshrl.u32 %v111, 7
  %v113 = vsub.s32 0, %v112
  %v114 = vrot.slane %v109, %v113
  %v124 = vunpack.c.l.b16 %v97
  %v125 = vunpack.c.l.b16 %v98
  %v126 = vunpack.c.l.b16 %v99
  %v127 = vunpack.c.l.b16 %v100
  %v128 = vunpack.c.l.b16 %v101
  %v129 = vunpack.c.l.b16 %v102
  %v130 = vunpack.c.l.b16 %v103
  %v131 = vunpack.c.l.b16 %v104
  %vm132 = vcmask 1041409
  %v133 = vsel %vm132, %v125, %v124
  %vm134 = vcmask 1042434
  %v135 = vsel %vm134, %v126, %v133
  %vm136 = vcmask 1043459
  %v137 = vsel %vm136, %v127, %v135
  %vm138 = vcmask 1044484
  %v139 = vsel %vm138, %v128, %v137
  %vm140 = vcmask 1045509
  %v141 = vsel %vm140, %v129, %v139
  %vm142 = vcmask 1046534
  %v143 = vsel %vm142, %v130, %v141
  %vm144 = vcmask 1047559
  %v145 = vsel %vm144, %v131, %v143
  %v146 = vpack.c.b16 %v145, %v145
  %v151 = vunpack.c.l.b16 %v105
  %v152 = vunpack.c.l.b16 %v106
  %v153 = vunpack.c.l.b16 %v107
  %v154 = vunpack.c.l.b16 %v108
  %v155 = vpack.c.b16 %v152, %v151
  %v156 = vpack.c.b16 %v154, %v153
  %vm159 = vcmask 261120
  %v161 = vsel %vm159, %v146, 0
  %163 = vmatprep.subr.bf16.mxu0 0
  %164 = vmatpush1.bf16.msra.mxu0 %v155
  %165 = vmatprep.subr.bf16.mxu0 0
  %166 = vmatpush1.bf16.msra.mxu0 %v156
  %167 = vmatprep.subr.bf16.mxu0 0
  %168 = vmatpush1.bf16.msra.mxu0 0
  %169 = vmatprep.subr.bf16.mxu0 0
  %170 = vmatpush1.bf16.msra.mxu0 0
  %171 = vmatprep.subr.bf16.mxu0 0
  %172 = vmatpush1.bf16.msra.mxu0 0
  %173 = vmatprep.subr.bf16.mxu0 0
  %174 = vmatpush1.bf16.msra.mxu0 0
  %175 = vmatprep.subr.bf16.mxu0 0
  %176 = vmatpush1.bf16.msra.mxu0 0
  %177 = vmatprep.subr.bf16.mxu0 0
  %178 = vmatpush1.bf16.msra.mxu0 0
  %179 = vmatprep.subr.bf16.mxu0 0
  %180 = vmatpush1.bf16.msra.mxu0 0
  %181 = vmatprep.subr.bf16.mxu0 0
  %182 = vmatpush1.bf16.msra.mxu0 0
  %183 = vmatprep.subr.bf16.mxu0 0
  %184 = vmatpush1.bf16.msra.mxu0 0
  %185 = vmatprep.subr.bf16.mxu0 0
  %186 = vmatpush1.bf16.msra.mxu0 0
  %187 = vmatprep.subr.bf16.mxu0 0
  %188 = vmatpush1.bf16.msra.mxu0 0
  %189 = vmatprep.subr.bf16.mxu0 0
  %190 = vmatpush1.bf16.msra.mxu0 0
  %191 = vmatprep.subr.bf16.mxu0 0
  %192 = vmatpush1.bf16.msra.mxu0 0
  %193 = vmatprep.subr.bf16.mxu0 0
  %194 = vmatpush1.bf16.msra.mxu0 0
  %195 = vmatprep.mubr.bf16.mxu0 0
  %196 = vmatmul.mubr.bf16.gmra.mrb[0].mxu0 %v161
  %v197 = vpop.f32.mrb[0].mxu0
  %v198 = vadd.f32 %v114, %v197
  %v199 = vpop.f32.mrb[0].mxu0
  %v200 = vpop.f32.mrb[0].mxu0
  %v201 = vpop.f32.mrb[0].mxu0
  %202 = vdwg.mxu0
  %203 = vst [vmem:[%s3] sm:$0xff] %v198
  // Predicated region
  $region14: #{resnet_forward.17} parent=0 // pred_check
    _
  $region15: #{resnet_forward.17} parent=0 // pred_check_branch
    %205 = sbr.rel (0) target = $region17
  $region16: #{resnet_forward.17} parent=0 // pred_region
    _
  $region17: #{resnet_forward.17} parent=0 // pred_fallthru
    _
  // Predicated region
  $region18: #{resnet_forward.17} parent=0 // pred_check
    _
  $region19: #{resnet_forward.17} parent=0 // pred_check_branch
    %207 = sbr.rel (0) target = $region21
  $region20: #{resnet_forward.17} parent=0 // pred_region
    _
  $region21: #{resnet_forward.17} parent=0 // pred_fallthru
    _

</llo_original>
